<compile_context>
chip_gen: v5e
topology: v5e:2x2
jax: 0.10.0
libtpu: 0.0.40
codegen_flags: <defaults>
</compile_context>

<pallas_src>
import functools
import math

import jax
import jax.numpy as jnp
from jax import lax
from jax.experimental import pallas as pl
from jax.experimental.pallas import tpu as pltpu


# ------------------------------ small helpers ------------------------------

def _round_up(x, m):
    return (x + m - 1) // m * m


def _tile(dim, tmax, align=1):
    """Pick (tile, padded_dim) for one matmul dimension.

    If the dim fits in one tile it is used untiled (full-dim blocks are exempt
    from the (8,128) rule).  Otherwise pick the largest `align`-multiple tile
    <= tmax that divides the aligned dim (avoids pad/slice HBM round-trips);
    fall back to tmax with padding only if no reasonable divisor exists.
    """
    if dim <= tmax:
        return dim, dim
    dim_a = _round_up(dim, align)
    tmax_a = max((tmax // align) * align, align)
    t = tmax_a
    while t > align and dim_a % t:
        t -= align
    if dim_a % t or t < max(tmax_a // 2, align):
        t = tmax_a
        dim_a = _round_up(dim_a, t)
    return t, dim_a


def _pad2d(a, rows, cols):
    pr, pc = rows - a.shape[0], cols - a.shape[1]
    if pr or pc:
        a = jnp.pad(a, ((0, pr), (0, pc)))
    return a


# --------------------- fused dense (matmul + epilogue) ----------------------

def fused_dense(x, w, b, *, activation="none", residual=None, ln=None,
                eps=1e-12, out_dtype=jnp.bfloat16,
                tm_max=512, tn_max=768, tk_max=768):
    """y = act(x @ w + b) [+ residual] [-> LayerNorm].

    MXU operands are bf16, accumulation and the epilogue run in f32.  Tiled
    over (M, N, K) with a VMEM accumulator; M/N grid axes are parallel
    (megacore-friendly), K is the innermost reduction axis.  Bias, activation,
    residual-add and LayerNorm run once per output tile in the K epilogue, so
    they never hit HBM as standalone passes.
    """
    M, K = x.shape
    N = w.shape[1]
    has_res = residual is not None
    has_ln = ln is not None
    if has_ln:
        # LayerNorm reduces over the full output dim -> keep N untiled
        # (fine for BERT hidden sizes; acc tile stays ~1.5 MiB at tm=512).
        tn_max = N

    tm, Mp = _tile(M, tm_max, 16)     # 16-row alignment for bf16 sublane packing
    tk, Kp = _tile(K, tk_max, 128)    # 128/256-multiples -> full MXU cadence
    tn, Np = _tile(N, tn_max, 128)
    if has_ln:
        assert tn == N and Np == N, "LayerNorm epilogue requires an untiled N"

    # Inputs arrive bf16 already (residual stream is bf16); astype is a no-op
    # then, as is _pad2d for tile-aligned dims.
    xp = _pad2d(x.astype(jnp.bfloat16), Mp, Kp)
    wp = _pad2d(w.astype(jnp.bfloat16), Kp, Np)
    bp = _pad2d(b.astype(jnp.float32).reshape(1, N), 1, Np)

    inputs = [xp, wp, bp]
    in_specs = [
        pl.BlockSpec((tm, tk), lambda i, j, k: (i, k)),
        # TODO(synk): sweep pipeline_mode=pl.Buffered(3) on the weight spec if
        # weight-DMA latency shows up exposed on v5e.
        pl.BlockSpec((tk, tn), lambda i, j, k: (k, j)),
        pl.BlockSpec((1, tn), lambda i, j, k: (0, j)),
    ]
    if has_res:
        inputs.append(_pad2d(residual.astype(jnp.bfloat16), Mp, Np))
        in_specs.append(pl.BlockSpec((tm, tn), lambda i, j, k: (i, j)))
    if has_ln:
        g, beta = ln
        inputs.append(_pad2d(g.astype(jnp.float32).reshape(1, N), 1, Np))
        inputs.append(_pad2d(beta.astype(jnp.float32).reshape(1, N), 1, Np))
        in_specs += [pl.BlockSpec((1, tn), lambda i, j, k: (0, j)),
                     pl.BlockSpec((1, tn), lambda i, j, k: (0, j))]

    def kernel(*args):
        x_ref, w_ref, b_ref = args[:3]
        pos = 3
        r_ref = g_ref = bt_ref = None
        if has_res:
            r_ref = args[pos]; pos += 1
        if has_ln:
            g_ref, bt_ref = args[pos], args[pos + 1]; pos += 2
        o_ref, acc_ref = args[pos], args[pos + 1]

        k = pl.program_id(2)

        @pl.when(k == 0)
        def _init():
            acc_ref[...] = jnp.zeros_like(acc_ref)

        acc_ref[...] += jnp.dot(x_ref[...], w_ref[...],
                                preferred_element_type=jnp.float32)

        # Epilogue runs once per (i, j) output tile.
        @pl.when(k == pl.num_programs(2) - 1)
        def _finalize():
            y = acc_ref[...] + b_ref[...]
            if activation == "gelu":
                # TODO(synk): HF BERT uses exact erf-GELU; tanh approximation
                # is used for guaranteed Mosaic lowering (~1e-3 relative diff).
                c = 0.7978845608028654
                y = 0.5 * y * (1.0 + jnp.tanh(c * (y + 0.044715 * y * y * y)))
            elif activation == "tanh":
                y = jnp.tanh(y)
            if r_ref is not None:
                y = y + r_ref[...].astype(jnp.float32)   # bf16 residual, f32 math
            if g_ref is not None:
                mean = jnp.mean(y, axis=-1, keepdims=True)
                var = jnp.mean(jnp.square(y - mean), axis=-1, keepdims=True)
                y = (y - mean) * lax.rsqrt(var + eps) * g_ref[...] + bt_ref[...]
            o_ref[...] = y.astype(o_ref.dtype)

    out_isz = jnp.dtype(out_dtype).itemsize
    flops = 2 * Mp * Kp * Np
    transc = Mp * Np if activation in ("gelu", "tanh") else 0
    bytes_accessed = (Mp * Kp + Kp * Np) * 2 + Mp * Np * out_isz
    if has_res:
        bytes_accessed += Mp * Np * 2

    # VMEM budget from actual tile bytes (double-buffered in/out + f32 acc),
    # 2x headroom, capped v7x-safe.
    est = (2 * tm * tk * 2 + 2 * tk * tn * 2 + 2 * tn * 4
           + 2 * tm * tn * out_isz + tm * tn * 4)
    if has_res:
        est += 2 * tm * tn * 2
    if has_ln:
        est += 4 * tn * 4
    vmem_limit = int(min(max(2 * est, 32 * 1024 * 1024), 48 * 1024 * 1024))

    out = pl.pallas_call(
        kernel,
        out_shape=jax.ShapeDtypeStruct((Mp, Np), out_dtype),
        grid=(Mp // tm, Np // tn, Kp // tk),
        in_specs=in_specs,
        out_specs=pl.BlockSpec((tm, tn), lambda i, j, k: (i, j)),
        scratch_shapes=[pltpu.VMEM((tm, tn), jnp.float32)],
        compiler_params=pltpu.CompilerParams(
            dimension_semantics=("parallel", "parallel", "arbitrary"),
            vmem_limit_bytes=vmem_limit),
        cost_estimate=pl.CostEstimate(flops=flops, transcendentals=transc,
                                      bytes_accessed=bytes_accessed),
    )(*inputs)
    return out[:M, :N]


# ------------------------------- layernorm ----------------------------------
# Only used once (embedding output); all other LayerNorms are fused into the
# preceding dense epilogue.  Computes in f32, stores the bf16 residual stream.

def _layernorm_kernel(x_ref, g_ref, b_ref, o_ref, *, eps):
    x = x_ref[...]
    mean = jnp.mean(x, axis=-1, keepdims=True)
    var = jnp.mean(jnp.square(x - mean), axis=-1, keepdims=True)
    o_ref[...] = ((x - mean) * lax.rsqrt(var + eps) * g_ref[...]
                  + b_ref[...]).astype(o_ref.dtype)


def layernorm(x, gamma, beta, eps, tm_max=1024):
    M, H = x.shape
    tm, Mp = _tile(M, tm_max, 16)
    xp = _pad2d(x.astype(jnp.float32), Mp, H)
    out = pl.pallas_call(
        functools.partial(_layernorm_kernel, eps=eps),
        out_shape=jax.ShapeDtypeStruct((Mp, H), jnp.bfloat16),
        grid=(Mp // tm,),
        in_specs=[pl.BlockSpec((tm, H), lambda i: (i, 0)),
                  pl.BlockSpec((1, H), lambda i: (0, 0)),
                  pl.BlockSpec((1, H), lambda i: (0, 0))],
        out_specs=pl.BlockSpec((tm, H), lambda i: (i, 0)),
        compiler_params=pltpu.CompilerParams(
            dimension_semantics=("parallel",)),
    )(xp, gamma.reshape(1, H), beta.reshape(1, H))
    return out[:M]


# ------------------------------- attention ----------------------------------

def _attn_kernel(*refs, hidden, dh, hpg, split_qkv):
    # Processes `hpg` heads in pairs: one 128-lane aligned load per pair for
    # Q/K/V and one 128-lane lane-dense store of the pair's context, so no
    # global concatenate and no long live ranges across all heads.
    # The 1/sqrt(dh) scale is folded into the Q weights at init.
    if split_qkv:
        q_ref, k_ref, v_ref, m_ref, o_ref = refs
        q_off = k_off = v_off = 0
    else:
        qkv_ref, m_ref, o_ref = refs
        q_ref = k_ref = v_ref = qkv_ref
        q_off, k_off, v_off = 0, hidden, 2 * hidden

    mask = m_ref[0]                                   # (1, S) additive mask
    n_pairs, rem = divmod(hpg, 2)
    # TODO(synk): for long sequences (S >= 1024, esp. v7x 64 MiB VMEM) switch
    # to a flash-style online softmax with a KV grid axis instead of
    # materializing the (S, S) scores.
    for p in range(n_pairs + rem):
        w = 2 * dh if p < n_pairs else dh
        off = 2 * p * dh
        q2 = q_ref[0, :, q_off + off:q_off + off + w]
        k2 = k_ref[0, :, k_off + off:k_off + off + w]
        v2 = v_ref[0, :, v_off + off:v_off + off + w]
        outs = []
        for s in range(w // dh):
            q = q2[:, s * dh:(s + 1) * dh]
            k = k2[:, s * dh:(s + 1) * dh]
            v = v2[:, s * dh:(s + 1) * dh]
            # TODO(synk): verify via pl.lower_as_mlir that this A @ B^T form
            # lowers without a per-head vxpose; feed K transposed if it does.
            sc = lax.dot_general(q, k, (((1,), (1,)), ((), ())),
                                 preferred_element_type=jnp.float32)
            sc = sc + mask
            sc = sc - jnp.max(sc, axis=-1, keepdims=True)
            pr = jnp.exp(sc)
            # approx reciprocal: ~1e-4 relative deviation from exact softmax.
            pr = pr * pl.reciprocal(jnp.sum(pr, axis=-1, keepdims=True),
                                    approx=True)
            outs.append(jnp.dot(pr.astype(v.dtype), v,
                                preferred_element_type=jnp.float32))
        pair = outs[0] if len(outs) == 1 else jnp.concatenate(outs, axis=-1)
        o_ref[0, :, off:off + w] = pair.astype(o_ref.dtype)


def attention(qkv, add_mask, hidden, heads):
    B, S, H3 = qkv.shape
    dh = hidden // heads

    # Head-group grid axis: feeds both v7x TensorCores even at batch 1-2 and
    # keeps each group's Q/K/V views 128-lane aligned.  Negligible cost on the
    # single-TC v5e/v6e (one extra grid step).
    if heads % 2 == 0 and (hidden // 2) % 128 == 0:
        G = 2
    else:
        G = 1
    gw = hidden // G
    hpg = heads // G
    split = (gw % 128 == 0)   # else fall back to one full (S, 3H) block
    if not split:
        G, gw, hpg = 1, hidden, heads

    kern = functools.partial(_attn_kernel, hidden=hidden, dh=dh, hpg=hpg,
                             split_qkv=split)
    mask_spec = pl.BlockSpec((1, 1, S), lambda b, g: (b, 0, 0))
    if split:
        # Three views of the same QKV slab, one gw-wide window each.
        in_specs = [
            pl.BlockSpec((1, S, gw), lambda b, g: (b, 0, g)),
            pl.BlockSpec((1, S, gw), lambda b, g, G=G: (b, 0, G + g)),
            pl.BlockSpec((1, S, gw), lambda b, g, G=G: (b, 0, 2 * G + g)),
            mask_spec,
        ]
        operands = (qkv, qkv, qkv, add_mask)
    else:
        in_specs = [pl.BlockSpec((1, S, H3), lambda b, g: (b, 0, 0)), mask_spec]
        operands = (qkv, add_mask)

    return pl.pallas_call(
        kern,
        out_shape=jax.ShapeDtypeStruct((B, S, hidden), jnp.bfloat16),
        grid=(B, G),
        in_specs=in_specs,
        out_specs=pl.BlockSpec((1, S, gw), lambda b, g: (b, 0, g)),
        compiler_params=pltpu.CompilerParams(
            dimension_semantics=("parallel", "parallel"),
            vmem_limit_bytes=32 * 1024 * 1024),
    )(*operands)


# ---------------------- pooler + classifier (one call) ----------------------

def _head_kernel(x_ref, pw_ref, pb_ref, cw_ref, cb_ref, o_ref):
    pooled = jnp.tanh(jnp.dot(x_ref[...], pw_ref[...],
                              preferred_element_type=jnp.float32) + pb_ref[...])
    o_ref[...] = (jnp.dot(pooled.astype(cw_ref.dtype), cw_ref[...],
                          preferred_element_type=jnp.float32) + cb_ref[...])


def pooler_classifier(cls_tok, pool_w, pool_b, cls_w, cls_b):
    """tanh pooler + classification head fused into a single tiny Pallas call.

    M=batch and N=num_labels are tiny, so launch overhead dominates: use one
    launch (not two) and pad the classifier columns to 128 lanes so the only
    store is lane-dense instead of a 3-lane masked partial store.
    """
    B, H = cls_tok.shape
    NL = cls_w.shape[1]
    Bp = _round_up(B, 8)
    NLp = _round_up(NL, 128)
    x = _pad2d(cls_tok.astype(jnp.bfloat16), Bp, H)
    cw = _pad2d(cls_w.astype(jnp.bfloat16), H, NLp)
    cb = _pad2d(cls_b.astype(jnp.float32).reshape(1, NL), 1, NLp)
    pb = pool_b.astype(jnp.float32).reshape(1, H)
    out = pl.pallas_call(
        _head_kernel,
        out_shape=jax.ShapeDtypeStruct((Bp, NLp), jnp.float32),
        grid=(1,),
        in_specs=[pl.BlockSpec((Bp, H), lambda i: (0, 0)),
                  pl.BlockSpec((H, H), lambda i: (0, 0)),
                  pl.BlockSpec((1, H), lambda i: (0, 0)),
                  pl.BlockSpec((H, NLp), lambda i: (0, 0)),
                  pl.BlockSpec((1, NLp), lambda i: (0, 0))],
        out_specs=pl.BlockSpec((Bp, NLp), lambda i: (0, 0)),
    )(x, pool_w.astype(jnp.bfloat16), pb, cw, cb)
    return out[:B, :NL]


# ------------------------------- parameters ---------------------------------

def init_params(key, cfg):
    H, I = cfg["hidden"], cfg["intermediate"]
    V, P, T = cfg["vocab"], cfg["max_pos"], cfg["type_vocab"]
    L, NL, nh = cfg["layers"], cfg["num_labels"], cfg["heads"]
    scale = 1.0 / math.sqrt(H // nh)
    std = 0.02
    keys = jax.random.split(key, 4 + L)

    def nrm(k, shape):
        return jax.random.normal(k, shape, jnp.float32) * std

    params = {
        "word_emb": nrm(keys[0], (V, H)),
        "pos_emb": nrm(keys[1], (P, H)),
        "tok_emb": nrm(keys[2], (T, H)),
        "emb_ln_g": jnp.ones((H,), jnp.float32),
        "emb_ln_b": jnp.zeros((H,), jnp.float32),
        "layers": [],
    }
    for li in range(L):
        lk = jax.random.split(keys[3 + li], 6)
        q_w, k_w, v_w = nrm(lk[0], (H, H)), nrm(lk[1], (H, H)), nrm(lk[2], (H, H))
        q_b = k_b = v_b = jnp.zeros((H,), jnp.float32)
        params["layers"].append({
            # Q/K/V fused into one (H, 3H) matmul; 1/sqrt(dh) folded into Q.
            # TODO(synk): on v7x-only deployments these weights could be fp8.
            "qkv_w": jnp.concatenate([q_w * scale, k_w, v_w], axis=1
                                     ).astype(jnp.bfloat16),
            "qkv_b": jnp.concatenate([q_b * scale, k_b, v_b], axis=0),
            "ao_w": nrm(lk[3], (H, H)).astype(jnp.bfloat16),
            "ao_b": jnp.zeros((H,), jnp.float32),
            "attn_ln_g": jnp.ones((H,), jnp.float32),
            "attn_ln_b": jnp.zeros((H,), jnp.float32),
            "ff_w1": nrm(lk[4], (H, I)).astype(jnp.bfloat16),
            "ff_b1": jnp.zeros((I,), jnp.float32),
            "ff_w2": nrm(lk[5], (I, H)).astype(jnp.bfloat16),
            "ff_b2": jnp.zeros((H,), jnp.float32),
            "ffn_ln_g": jnp.ones((H,), jnp.float32),
            "ffn_ln_b": jnp.zeros((H,), jnp.float32),
        })
    hk = jax.random.split(keys[3 + L], 2)
    params["pool_w"] = nrm(hk[0], (H, H)).astype(jnp.bfloat16)
    params["pool_b"] = jnp.zeros((H,), jnp.float32)
    params["cls_w"] = nrm(hk[1], (H, NL)).astype(jnp.bfloat16)
    params["cls_b"] = jnp.zeros((NL,), jnp.float32)
    return params


# --------------------------------- forward ----------------------------------

def bert_forward(params, input_ids, token_type_ids, attention_mask, cfg):
    B, S = input_ids.shape
    H, nh = cfg["hidden"], cfg["heads"]
    eps = cfg["eps"]

    # Embeddings (gathers = glue), then LayerNorm in a Pallas kernel.
    pos_ids = jnp.arange(S)
    emb = (jnp.take(params["word_emb"], input_ids, axis=0)
           + params["pos_emb"][pos_ids][None, :, :]
           + jnp.take(params["tok_emb"], token_type_ids, axis=0))
    # bf16 residual stream; all per-layer LayerNorms run in f32 inside the
    # fused dense epilogues and store back to bf16.
    x = layernorm(emb.reshape(B * S, H), params["emb_ln_g"],
                  params["emb_ln_b"], eps)

    # Additive attention mask, (B, 1, S): 0 keep, -1e4 pad (HF convention).
    add_mask = ((1.0 - attention_mask.astype(jnp.float32)) * -10000.0
                ).reshape(B, 1, S)

    for layer in params["layers"]:
        # fused QKV projection: one (B*S, H) x (H, 3H) matmul, bf16 out.
        qkv = fused_dense(x, layer["qkv_w"], layer["qkv_b"])
        ctx = attention(qkv.reshape(B, S, 3 * H), add_mask, H, nh)
        # attention output projection; residual + LayerNorm fused in epilogue.
        x = fused_dense(ctx.reshape(B * S, H), layer["ao_w"], layer["ao_b"],
                        residual=x, ln=(layer["attn_ln_g"], layer["attn_ln_b"]),
                        eps=eps)
        # feed-forward: GELU fused into matmul 1, residual+LN into matmul 2.
        hmid = fused_dense(x, layer["ff_w1"], layer["ff_b1"], activation="gelu")
        x = fused_dense(hmid, layer["ff_w2"], layer["ff_b2"],
                        residual=x, ln=(layer["ffn_ln_g"], layer["ffn_ln_b"]),
                        eps=eps)

    # Pooler (tanh on [CLS]) + classification head -> logits, one small call.
    cls = x.reshape(B, S, H)[:, 0, :]
    logits = pooler_classifier(cls, params["pool_w"], params["pool_b"],
                               params["cls_w"], params["cls_b"])
    return logits


# ----------------------------------- main ------------------------------------

if __name__ == "__main__":
    cfg = dict(vocab=96, hidden=32, intermediate=64, heads=2, layers=2,
               max_pos=16, type_vocab=2, num_labels=3, eps=1e-12)

    key = jax.random.PRNGKey(0)
    pkey, dkey = jax.random.split(key)
    params = init_params(pkey, cfg)

    B, S = 2, 8
    input_ids = jax.random.randint(dkey, (B, S), 0, cfg["vocab"], dtype=jnp.int32)
    token_type_ids = jnp.zeros((B, S), jnp.int32)
    attention_mask = jnp.ones((B, S), jnp.int32)

    @jax.jit
    def fwd(p, ii, tt, am):
        return bert_forward(p, ii, tt, am, cfg)

    logits = fwd(params, input_ids, token_type_ids, attention_mask)
    logits = jax.block_until_ready(logits)
    assert logits.shape == (B, cfg["num_labels"])
    assert logits.dtype == jnp.float32
    assert bool(jnp.all(jnp.isfinite(logits)))
    print("KERNEL_OK")
</pallas_src>

<mosaic_0001>
module attributes {stable_mosaic.version = 11 : i64} {
  func.func @_layernorm_kernel(%arg0: i32, %arg1: memref<16x32xf32, #tpu.memory_space<vmem>>, %arg2: memref<1x32xf32, #tpu.memory_space<vmem>>, %arg3: memref<1x32xf32, #tpu.memory_space<vmem>>, %arg4: memref<16x32xbf16, #tpu.memory_space<vmem>>) attributes {dimension_semantics = [#tpu.dimension_semantics<parallel>], iteration_bounds = array<i64: 1>, scalar_prefetch = 0 : i64, scratch_operands = 0 : i64, tpu.core_type = #tpu.core_type<tc>, window_params = [{transform_indices = @transform_0, window_bounds = array<i64: 16, 32>}, {pipeline_mode = #tpu.pipeline_mode<synchronous>, transform_indices = @transform_1, window_bounds = array<i64: 1, 32>}, {pipeline_mode = #tpu.pipeline_mode<synchronous>, transform_indices = @transform_2, window_bounds = array<i64: 1, 32>}, {transform_indices = @transform_3, window_bounds = array<i64: 16, 32>}]} {
    %c0 = arith.constant 0 : index
    %c0_0 = arith.constant 0 : index
    %0 = vector.load %arg1[%c0, %c0_0] : memref<16x32xf32, #tpu.memory_space<vmem>>, vector<16x32xf32>
    %cst = arith.constant dense<0.000000e+00> : vector<16xf32>
    %1 = vector.multi_reduction <add>, %0, %cst [1] : vector<16x32xf32> to vector<16xf32>
    %2 = vector.shape_cast %1 : vector<16xf32> to vector<16x1xf32>
    %cst_1 = arith.constant 3.200000e+01 : f32
    %3 = vector.broadcast %cst_1 : f32 to vector<16x1xf32>
    %4 = arith.divf %2, %3 : vector<16x1xf32>
    %5 = vector.broadcast %4 : vector<16x1xf32> to vector<16x32xf32>
    %6 = arith.subf %0, %5 : vector<16x32xf32>
    %7 = arith.mulf %6, %6 : vector<16x32xf32>
    %cst_2 = arith.constant dense<0.000000e+00> : vector<16xf32>
    %8 = vector.multi_reduction <add>, %7, %cst_2 [1] : vector<16x32xf32> to vector<16xf32>
    %9 = vector.shape_cast %8 : vector<16xf32> to vector<16x1xf32>
    %cst_3 = arith.constant 3.200000e+01 : f32
    %10 = vector.broadcast %cst_3 : f32 to vector<16x1xf32>
    %11 = arith.divf %9, %10 : vector<16x1xf32>
    %12 = vector.broadcast %4 : vector<16x1xf32> to vector<16x32xf32>
    %13 = arith.subf %0, %12 : vector<16x32xf32>
    %cst_4 = arith.constant 9.99999996E-13 : f32
    %14 = vector.broadcast %cst_4 : f32 to vector<16x1xf32>
    %15 = arith.addf %11, %14 : vector<16x1xf32>
    %16 = math.rsqrt %15 : vector<16x1xf32>
    %17 = vector.broadcast %16 : vector<16x1xf32> to vector<16x32xf32>
    %18 = arith.mulf %13, %17 : vector<16x32xf32>
    %c0_5 = arith.constant 0 : index
    %c0_6 = arith.constant 0 : index
    %19 = vector.load %arg2[%c0_5, %c0_6] : memref<1x32xf32, #tpu.memory_space<vmem>>, vector<1x32xf32>
    %20 = vector.broadcast %19 : vector<1x32xf32> to vector<16x32xf32>
    %21 = arith.mulf %18, %20 : vector<16x32xf32>
    %c0_7 = arith.constant 0 : index
    %c0_8 = arith.constant 0 : index
    %22 = vector.load %arg3[%c0_7, %c0_8] : memref<1x32xf32, #tpu.memory_space<vmem>>, vector<1x32xf32>
    %23 = vector.broadcast %22 : vector<1x32xf32> to vector<16x32xf32>
    %24 = arith.addf %21, %23 : vector<16x32xf32>
    %25 = arith.truncf %24 : vector<16x32xf32> to vector<16x32xbf16>
    %c0_9 = arith.constant 0 : index
    %c0_10 = arith.constant 0 : index
    %26 = vector.load %arg4[%c0_9, %c0_10] : memref<16x32xbf16, #tpu.memory_space<vmem>>, vector<16x32xbf16>
    tpu.vector_store %arg4[%c0_9, %c0_10], %25 {strides = array<i32>} : memref<16x32xbf16, #tpu.memory_space<vmem>>, vector<16x32xbf16>,
    return
  }
  func.func @transform_0(%arg0: i32) -> (i32, i32) {
    %c0_i32 = arith.constant 0 : i32
    %c0_i32_0 = arith.constant 0 : i32
    return %arg0, %c0_i32 : i32, i32
  }
  func.func @transform_1(%arg0: i32) -> (i32, i32) {
    %c0_i32 = arith.constant 0 : i32
    %c0_i32_0 = arith.constant 0 : i32
    %c0_i32_1 = arith.constant 0 : i32
    return %c0_i32, %c0_i32_0 : i32, i32
  }
  func.func @transform_2(%arg0: i32) -> (i32, i32) {
    %c0_i32 = arith.constant 0 : i32
    %c0_i32_0 = arith.constant 0 : i32
    %c0_i32_1 = arith.constant 0 : i32
    return %c0_i32, %c0_i32_0 : i32, i32
  }
  func.func @transform_3(%arg0: i32) -> (i32, i32) {
    %c0_i32 = arith.constant 0 : i32
    %c0_i32_0 = arith.constant 0 : i32
    return %arg0, %c0_i32 : i32, i32
  }
}

module attributes {stable_mosaic.version = 11 : i64} {
  func.func @kernel(%arg0: i32, %arg1: i32, %arg2: i32, %arg3: memref<16x32xbf16, #tpu.memory_space<vmem>>, %arg4: memref<32x96xbf16, #tpu.memory_space<vmem>>, %arg5: memref<1x96xf32, #tpu.memory_space<vmem>>, %arg6: memref<16x96xbf16, #tpu.memory_space<vmem>>, %arg7: memref<16x96xf32, #tpu.memory_space<vmem>>) attributes {dimension_semantics = [#tpu.dimension_semantics<parallel>, #tpu.dimension_semantics<parallel>, #tpu.dimension_semantics<arbitrary>], iteration_bounds = array<i64: 1, 1, 1>, scalar_prefetch = 0 : i64, scratch_operands = 1 : i64, tpu.core_type = #tpu.core_type<tc>, window_params = [{transform_indices = @transform_0, window_bounds = array<i64: 16, 32>}, {transform_indices = @transform_1, window_bounds = array<i64: 32, 96>}, {transform_indices = @transform_2, window_bounds = array<i64: 1, 96>}, {transform_indices = @transform_3, window_bounds = array<i64: 16, 96>}]} {
    %c0_i32 = arith.constant 0 : i32
    %0 = arith.cmpi eq, %arg2, %c0_i32 : i32
    %1 = arith.extui %0 : i1 to i32
    %c0_i32_0 = arith.constant 0 : i32
    %2 = arith.cmpi ne, %1, %c0_i32_0 : i32
    scf.if %2 {
      %cst_10 = arith.constant 0.000000e+00 : f32
      %12 = vector.broadcast %cst_10 : f32 to vector<16x96xf32>
      %c0_11 = arith.constant 0 : index
      %c0_12 = arith.constant 0 : index
      %13 = vector.load %arg7[%c0_11, %c0_12] : memref<16x96xf32, #tpu.memory_space<vmem>>, vector<16x96xf32>
      tpu.vector_store %arg7[%c0_11, %c0_12], %12 {strides = array<i32>} : memref<16x96xf32, #tpu.memory_space<vmem>>, vector<16x96xf32>,
    } else {
    }
    %c0 = arith.constant 0 : index
    %c0_1 = arith.constant 0 : index
    %3 = vector.load %arg7[%c0, %c0_1] : memref<16x96xf32, #tpu.memory_space<vmem>>, vector<16x96xf32>
    %c0_2 = arith.constant 0 : index
    %c0_3 = arith.constant 0 : index
    %4 = vector.load %arg3[%c0_2, %c0_3] : memref<16x32xbf16, #tpu.memory_space<vmem>>, vector<16x32xbf16>
    %c0_4 = arith.constant 0 : index
    %c0_5 = arith.constant 0 : index
    %5 = vector.load %arg4[%c0_4, %c0_5] : memref<32x96xbf16, #tpu.memory_space<vmem>>, vector<32x96xbf16>
    %cst = arith.constant dense<0.000000e+00> : vector<16x96xf32>
    %6 = tpu.matmul %4, %5, %cst {dimension_numbers = #tpu.dot_dimension_numbers<[1], [0], [0], [1], [0, 0, 1, 1], [], []>} : vector<16x32xbf16>, vector<32x96xbf16>, vector<16x96xf32> -> vector<16x96xf32>
    %7 = arith.addf %3, %6 : vector<16x96xf32>
    %c0_6 = arith.constant 0 : index
    %c0_7 = arith.constant 0 : index
    %8 = vector.load %arg7[%c0_6, %c0_7] : memref<16x96xf32, #tpu.memory_space<vmem>>, vector<16x96xf32>
    tpu.vector_store %arg7[%c0_6, %c0_7], %7 {strides = array<i32>} : memref<16x96xf32, #tpu.memory_space<vmem>>, vector<16x96xf32>,
    %c0_i32_8 = arith.constant 0 : i32
    %9 = arith.cmpi eq, %arg2, %c0_i32_8 : i32
    %10 = arith.extui %9 : i1 to i32
    %c0_i32_9 = arith.constant 0 : i32
    %11 = arith.cmpi ne, %10, %c0_i32_9 : i32
    scf.if %11 {
      %c0_10 = arith.constant 0 : index
      %c0_11 = arith.constant 0 : index
      %12 = vector.load %arg7[%c0_10, %c0_11] : memref<16x96xf32, #tpu.memory_space<vmem>>, vector<16x96xf32>
      %c0_12 = arith.constant 0 : index
      %c0_13 = arith.constant 0 : index
      %13 = vector.load %arg5[%c0_12, %c0_13] : memref<1x96xf32, #tpu.memory_space<vmem>>, vector<1x96xf32>
      %14 = vector.broadcast %13 : vector<1x96xf32> to vector<16x96xf32>
      %15 = arith.addf %12, %14 : vector<16x96xf32>
      %16 = arith.truncf %15 : vector<16x96xf32> to vector<16x96xbf16>
      %c0_14 = arith.constant 0 : index
      %c0_15 = arith.constant 0 : index
      %17 = vector.load %arg6[%c0_14, %c0_15] : memref<16x96xbf16, #tpu.memory_space<vmem>>, vector<16x96xbf16>
      tpu.vector_store %arg6[%c0_14, %c0_15], %16 {strides = array<i32>} : memref<16x96xbf16, #tpu.memory_space<vmem>>, vector<16x96xbf16>,
    } else {
    }
    return
  }
  func.func @transform_0(%arg0: i32, %arg1: i32, %arg2: i32) -> (i32, i32) {
    %c0_i32 = arith.constant 0 : i32
    return %arg0, %arg2 : i32, i32
  }
  func.func @transform_1(%arg0: i32, %arg1: i32, %arg2: i32) -> (i32, i32) {
    %c0_i32 = arith.constant 0 : i32
    return %arg2, %arg1 : i32, i32
  }
  func.func @transform_2(%arg0: i32, %arg1: i32, %arg2: i32) -> (i32, i32) {
    %c0_i32 = arith.constant 0 : i32
    %c0_i32_0 = arith.constant 0 : i32
    return %c0_i32, %arg1 : i32, i32
  }
  func.func @transform_3(%arg0: i32, %arg1: i32, %arg2: i32) -> (i32, i32) {
    %c0_i32 = arith.constant 0 : i32
    return %arg0, %arg1 : i32, i32
  }
}

module attributes {stable_mosaic.version = 11 : i64} {
  func.func @kernel(%arg0: i32, %arg1: i32, %arg2: i32, %arg3: memref<16x32xbf16, #tpu.memory_space<vmem>>, %arg4: memref<32x32xbf16, #tpu.memory_space<vmem>>, %arg5: memref<1x32xf32, #tpu.memory_space<vmem>>, %arg6: memref<16x32xbf16, #tpu.memory_space<vmem>>, %arg7: memref<1x32xf32, #tpu.memory_space<vmem>>, %arg8: memref<1x32xf32, #tpu.memory_space<vmem>>, %arg9: memref<16x32xbf16, #tpu.memory_space<vmem>>, %arg10: memref<16x32xf32, #tpu.memory_space<vmem>>) attributes {dimension_semantics = [#tpu.dimension_semantics<parallel>, #tpu.dimension_semantics<parallel>, #tpu.dimension_semantics<arbitrary>], iteration_bounds = array<i64: 1, 1, 1>, scalar_prefetch = 0 : i64, scratch_operands = 1 : i64, tpu.core_type = #tpu.core_type<tc>, window_params = [{transform_indices = @transform_0, window_bounds = array<i64: 16, 32>}, {transform_indices = @transform_1, window_bounds = array<i64: 32, 32>}, {transform_indices = @transform_2, window_bounds = array<i64: 1, 32>}, {transform_indices = @transform_3, window_bounds = array<i64: 16, 32>}, {transform_indices = @transform_4, window_bounds = array<i64: 1, 32>}, {transform_indices = @transform_5, window_bounds = array<i64: 1, 32>}, {transform_indices = @transform_6, window_bounds = array<i64: 16, 32>}]} {
    %c0_i32 = arith.constant 0 : i32
    %0 = arith.cmpi eq, %arg2, %c0_i32 : i32
    %1 = arith.extui %0 : i1 to i32
    %c0_i32_0 = arith.constant 0 : i32
    %2 = arith.cmpi ne, %1, %c0_i32_0 : i32
    scf.if %2 {
      %cst_10 = arith.constant 0.000000e+00 : f32
      %12 = vector.broadcast %cst_10 : f32 to vector<16x32xf32>
      %c0_11 = arith.constant 0 : index
      %c0_12 = arith.constant 0 : index
      %13 = vector.load %arg10[%c0_11, %c0_12] : memref<16x32xf32, #tpu.memory_space<vmem>>, vector<16x32xf32>
      tpu.vector_store %arg10[%c0_11, %c0_12], %12 {strides = array<i32>} : memref<16x32xf32, #tpu.memory_space<vmem>>, vector<16x32xf32>,
    } else {
    }
    %c0 = arith.constant 0 : index
    %c0_1 = arith.constant 0 : index
    %3 = vector.load %arg10[%c0, %c0_1] : memref<16x32xf32, #tpu.memory_space<vmem>>, vector<16x32xf32>
    %c0_2 = arith.constant 0 : index
    %c0_3 = arith.constant 0 : index
    %4 = vector.load %arg3[%c0_2, %c0_3] : memref<16x32xbf16, #tpu.memory_space<vmem>>, vector<16x32xbf16>
    %c0_4 = arith.constant 0 : index
    %c0_5 = arith.constant 0 : index
    %5 = vector.load %arg4[%c0_4, %c0_5] : memref<32x32xbf16, #tpu.memory_space<vmem>>, vector<32x32xbf16>
    %cst = arith.constant dense<0.000000e+00> : vector<16x32xf32>
    %6 = tpu.matmul %4, %5, %cst {dimension_numbers = #tpu.dot_dimension_numbers<[1], [0], [0], [1], [0, 0, 1, 1], [], []>} : vector<16x32xbf16>, vector<32x32xbf16>, vector<16x32xf32> -> vector<16x32xf32>
    %7 = arith.addf %3, %6 : vector<16x32xf32>
    %c0_6 = arith.constant 0 : index
    %c0_7 = arith.constant 0 : index
    %8 = vector.load %arg10[%c0_6, %c0_7] : memref<16x32xf32, #tpu.memory_space<vmem>>, vector<16x32xf32>
    tpu.vector_store %arg10[%c0_6, %c0_7], %7 {strides = array<i32>} : memref<16x32xf32, #tpu.memory_space<vmem>>, vector<16x32xf32>,
    %c0_i32_8 = arith.constant 0 : i32
    %9 = arith.cmpi eq, %arg2, %c0_i32_8 : i32
    %10 = arith.extui %9 : i1 to i32
    %c0_i32_9 = arith.constant 0 : i32
    %11 = arith.cmpi ne, %10, %c0_i32_9 : i32
    scf.if %11 {
      %c0_10 = arith.constant 0 : index
      %c0_11 = arith.constant 0 : index
      %12 = vector.load %arg10[%c0_10, %c0_11] : memref<16x32xf32, #tpu.memory_space<vmem>>, vector<16x32xf32>
      %c0_12 = arith.constant 0 : index
      %c0_13 = arith.constant 0 : index
      %13 = vector.load %arg5[%c0_12, %c0_13] : memref<1x32xf32, #tpu.memory_space<vmem>>, vector<1x32xf32>
      %14 = vector.broadcast %13 : vector<1x32xf32> to vector<16x32xf32>
      %15 = arith.addf %12, %14 : vector<16x32xf32>
      %c0_14 = arith.constant 0 : index
      %c0_15 = arith.constant 0 : index
      %16 = vector.load %arg6[%c0_14, %c0_15] : memref<16x32xbf16, #tpu.memory_space<vmem>>, vector<16x32xbf16>
      %17 = arith.extf %16 : vector<16x32xbf16> to vector<16x32xf32>
      %18 = arith.addf %15, %17 : vector<16x32xf32>
      %cst_16 = arith.constant dense<0.000000e+00> : vector<16xf32>
      %19 = vector.multi_reduction <add>, %18, %cst_16 [1] : vector<16x32xf32> to vector<16xf32>
      %20 = vector.shape_cast %19 : vector<16xf32> to vector<16x1xf32>
      %cst_17 = arith.constant 3.200000e+01 : f32
      %21 = vector.broadcast %cst_17 : f32 to vector<16x1xf32>
      %22 = arith.divf %20, %21 : vector<16x1xf32>
      %23 = vector.broadcast %22 : vector<16x1xf32> to vector<16x32xf32>
      %24 = arith.subf %18, %23 : vector<16x32xf32>
      %25 = arith.mulf %24, %24 : vector<16x32xf32>
      %cst_18 = arith.constant dense<0.000000e+00> : vector<16xf32>
      %26 = vector.multi_reduction <add>, %25, %cst_18 [1] : vector<16x32xf32> to vector<16xf32>
      %27 = vector.shape_cast %26 : vector<16xf32> to vector<16x1xf32>
      %cst_19 = arith.constant 3.200000e+01 : f32
      %28 = vector.broadcast %cst_19 : f32 to vector<16x1xf32>
      %29 = arith.divf %27, %28 : vector<16x1xf32>
      %30 = vector.broadcast %22 : vector<16x1xf32> to vector<16x32xf32>
      %31 = arith.subf %18, %30 : vector<16x32xf32>
      %cst_20 = arith.constant 9.99999996E-13 : f32
      %32 = vector.broadcast %cst_20 : f32 to vector<16x1xf32>
      %33 = arith.addf %29, %32 : vector<16x1xf32>
      %34 = math.rsqrt %33 : vector<16x1xf32>
      %35 = vector.broadcast %34 : vector<16x1xf32> to vector<16x32xf32>
      %36 = arith.mulf %31, %35 : vector<16x32xf32>
      %c0_21 = arith.constant 0 : index
      %c0_22 = arith.constant 0 : index
      %37 = vector.load %arg7[%c0_21, %c0_22] : memref<1x32xf32, #tpu.memory_space<vmem>>, vector<1x32xf32>
      %38 = vector.broadcast %37 : vector<1x32xf32> to vector<16x32xf32>
      %39 = arith.mulf %36, %38 : vector<16x32xf32>
      %c0_23 = arith.constant 0 : index
      %c0_24 = arith.constant 0 : index
      %40 = vector.load %arg8[%c0_23, %c0_24] : memref<1x32xf32, #tpu.memory_space<vmem>>, vector<1x32xf32>
      %41 = vector.broadcast %40 : vector<1x32xf32> to vector<16x32xf32>
      %42 = arith.addf %39, %41 : vector<16x32xf32>
      %43 = arith.truncf %42 : vector<16x32xf32> to vector<16x32xbf16>
      %c0_25 = arith.constant 0 : index
      %c0_26 = arith.constant 0 : index
      %44 = vector.load %arg9[%c0_25, %c0_26] : memref<16x32xbf16, #tpu.memory_space<vmem>>, vector<16x32xbf16>
      tpu.vector_store %arg9[%c0_25, %c0_26], %43 {strides = array<i32>} : memref<16x32xbf16, #tpu.memory_space<vmem>>, vector<16x32xbf16>,
    } else {
    }
    return
  }
  func.func @transform_0(%arg0: i32, %arg1: i32, %arg2: i32) -> (i32, i32) {
    %c0_i32 = arith.constant 0 : i32
    return %arg0, %arg2 : i32, i32
  }
  func.func @transform_1(%arg0: i32, %arg1: i32, %arg2: i32) -> (i32, i32) {
    %c0_i32 = arith.constant 0 : i32
    return %arg2, %arg1 : i32, i32
  }
  func.func @transform_2(%arg0: i32, %arg1: i32, %arg2: i32) -> (i32, i32) {
    %c0_i32 = arith.constant 0 : i32
    %c0_i32_0 = arith.constant 0 : i32
    return %c0_i32, %arg1 : i32, i32
  }
  func.func @transform_3(%arg0: i32, %arg1: i32, %arg2: i32) -> (i32, i32) {
    %c0_i32 = arith.constant 0 : i32
    return %arg0, %arg1 : i32, i32
  }
  func.func @transform_4(%arg0: i32, %arg1: i32, %arg2: i32) -> (i32, i32) {
    %c0_i32 = arith.constant 0 : i32
    %c0_i32_0 = arith.constant 0 : i32
    return %c0_i32, %arg1 : i32, i32
  }
  func.func @transform_5(%arg0: i32, %arg1: i32, %arg2: i32) -> (i32, i32) {
    %c0_i32 = arith.constant 0 : i32
    %c0_i32_0 = arith.constant 0 : i32
    return %c0_i32, %arg1 : i32, i32
  }
  func.func @transform_6(%arg0: i32, %arg1: i32, %arg2: i32) -> (i32, i32) {
    %c0_i32 = arith.constant 0 : i32
    return %arg0, %arg1 : i32, i32
  }
}

module attributes {stable_mosaic.version = 11 : i64} {
  func.func @_attn_kernel(%arg0: i32, %arg1: i32, %arg2: memref<1x8x96xbf16, #tpu.memory_space<vmem>>, %arg3: memref<1x1x8xf32, #tpu.memory_space<vmem>>, %arg4: memref<1x8x32xbf16, #tpu.memory_space<vmem>>) attributes {dimension_semantics = [#tpu.dimension_semantics<parallel>, #tpu.dimension_semantics<parallel>], iteration_bounds = array<i64: 2, 1>, scalar_prefetch = 0 : i64, scratch_operands = 0 : i64, tpu.core_type = #tpu.core_type<tc>, window_params = [{transform_indices = @transform_0, window_bounds = array<i64: 1, 8, 96>}, {transform_indices = @transform_1, window_bounds = array<i64: 1, 1, 8>}, {transform_indices = @transform_2, window_bounds = array<i64: 1, 8, 32>}]} {
    %c0 = arith.constant 0 : index
    %c0_0 = arith.constant 0 : index
    %c0_1 = arith.constant 0 : index
    %0 = vector.load %arg3[%c0, %c0_0, %c0_1] : memref<1x1x8xf32, #tpu.memory_space<vmem>>, vector<1x1x8xf32>
    %1 = vector.shape_cast %0 : vector<1x1x8xf32> to vector<1x8xf32>
    %c0_2 = arith.constant 0 : index
    %c0_3 = arith.constant 0 : index
    %c0_4 = arith.constant 0 : index
    %2 = vector.load %arg2[%c0_2, %c0_3, %c0_4] : memref<1x8x96xbf16, #tpu.memory_space<vmem>>, vector<1x8x32xbf16>
    %3 = vector.shape_cast %2 : vector<1x8x32xbf16> to vector<8x32xbf16>
    %c0_5 = arith.constant 0 : index
    %c0_6 = arith.constant 0 : index
    %c32 = arith.constant 32 : index
    %4 = vector.load %arg2[%c0_5, %c0_6, %c32] : memref<1x8x96xbf16, #tpu.memory_space<vmem>>, vector<1x8x32xbf16>
    %5 = vector.shape_cast %4 : vector<1x8x32xbf16> to vector<8x32xbf16>
    %c0_7 = arith.constant 0 : index
    %c0_8 = arith.constant 0 : index
    %c64 = arith.constant 64 : index
    %6 = vector.load %arg2[%c0_7, %c0_8, %c64] : memref<1x8x96xbf16, #tpu.memory_space<vmem>>, vector<1x8x32xbf16>
    %7 = vector.shape_cast %6 : vector<1x8x32xbf16> to vector<8x32xbf16>
    %8 = vector.extract_strided_slice %3 {offsets = [0, 0], sizes = [8, 16], strides = [1, 1]} : vector<8x32xbf16> to vector<8x16xbf16>
    %9 = vector.extract_strided_slice %5 {offsets = [0, 0], sizes = [8, 16], strides = [1, 1]} : vector<8x32xbf16> to vector<8x16xbf16>
    %10 = vector.extract_strided_slice %7 {offsets = [0, 0], sizes = [8, 16], strides = [1, 1]} : vector<8x32xbf16> to vector<8x16xbf16>
    %cst = arith.constant dense<0.000000e+00> : vector<8x8xf32>
    %11 = tpu.matmul %8, %9, %cst {dimension_numbers = #tpu.dot_dimension_numbers<[1], [1], [0], [0], [0, 0, 1, 0], [], []>} : vector<8x16xbf16>, vector<8x16xbf16>, vector<8x8xf32> -> vector<8x8xf32>
    %12 = vector.broadcast %1 : vector<1x8xf32> to vector<8x8xf32>
    %13 = arith.addf %11, %12 : vector<8x8xf32>
    %cst_9 = arith.constant dense<0xFF800000> : vector<8xf32>
    %14 = vector.multi_reduction <maximumf>, %13, %cst_9 [1] : vector<8x8xf32> to vector<8xf32>
    %15 = vector.shape_cast %14 : vector<8xf32> to vector<8x1xf32>
    %16 = vector.broadcast %15 : vector<8x1xf32> to vector<8x8xf32>
    %17 = arith.subf %13, %16 : vector<8x8xf32>
    %18 = math.exp %17 : vector<8x8xf32>
    %cst_10 = arith.constant dense<0.000000e+00> : vector<8xf32>
    %19 = vector.multi_reduction <add>, %18, %cst_10 [1] : vector<8x8xf32> to vector<8xf32>
    %20 = vector.shape_cast %19 : vector<8xf32> to vector<8x1xf32>
    %21 = tpu.reciprocal %20 {approx = true} : vector<8x1xf32> -> vector<8x1xf32>
    %22 = vector.broadcast %21 : vector<8x1xf32> to vector<8x8xf32>
    %23 = arith.mulf %18, %22 : vector<8x8xf32>
    %24 = arith.truncf %23 : vector<8x8xf32> to vector<8x8xbf16>
    %cst_11 = arith.constant dense<0.000000e+00> : vector<8x16xf32>
    %25 = tpu.matmul %24, %10, %cst_11 {dimension_numbers = #tpu.dot_dimension_numbers<[1], [0], [0], [1], [0, 0, 1, 1], [], []>} : vector<8x8xbf16>, vector<8x16xbf16>, vector<8x16xf32> -> vector<8x16xf32>
    %26 = vector.extract_strided_slice %3 {offsets = [0, 16], sizes = [8, 16], strides = [1, 1]} : vector<8x32xbf16> to vector<8x16xbf16>
    %27 = vector.extract_strided_slice %5 {offsets = [0, 16], sizes = [8, 16], strides = [1, 1]} : vector<8x32xbf16> to vector<8x16xbf16>
    %28 = vector.extract_strided_slice %7 {offsets = [0, 16], sizes = [8, 16], strides = [1, 1]} : vector<8x32xbf16> to vector<8x16xbf16>
    %cst_12 = arith.constant dense<0.000000e+00> : vector<8x8xf32>
    %29 = tpu.matmul %26, %27, %cst_12 {dimension_numbers = #tpu.dot_dimension_numbers<[1], [1], [0], [0], [0, 0, 1, 0], [], []>} : vector<8x16xbf16>, vector<8x16xbf16>, vector<8x8xf32> -> vector<8x8xf32>
    %30 = vector.broadcast %1 : vector<1x8xf32> to vector<8x8xf32>
    %31 = arith.addf %29, %30 : vector<8x8xf32>
    %cst_13 = arith.constant dense<0xFF800000> : vector<8xf32>
    %32 = vector.multi_reduction <maximumf>, %31, %cst_13 [1] : vector<8x8xf32> to vector<8xf32>
    %33 = vector.shape_cast %32 : vector<8xf32> to vector<8x1xf32>
    %34 = vector.broadcast %33 : vector<8x1xf32> to vector<8x8xf32>
    %35 = arith.subf %31, %34 : vector<8x8xf32>
    %36 = math.exp %35 : vector<8x8xf32>
    %cst_14 = arith.constant dense<0.000000e+00> : vector<8xf32>
    %37 = vector.multi_reduction <add>, %36, %cst_14 [1] : vector<8x8xf32> to vector<8xf32>
    %38 = vector.shape_cast %37 : vector<8xf32> to vector<8x1xf32>
    %39 = tpu.reciprocal %38 {approx = true} : vector<8x1xf32> -> vector<8x1xf32>
    %40 = vector.broadcast %39 : vector<8x1xf32> to vector<8x8xf32>
    %41 = arith.mulf %36, %40 : vector<8x8xf32>
    %42 = arith.truncf %41 : vector<8x8xf32> to vector<8x8xbf16>
    %cst_15 = arith.constant dense<0.000000e+00> : vector<8x16xf32>
    %43 = tpu.matmul %42, %28, %cst_15 {dimension_numbers = #tpu.dot_dimension_numbers<[1], [0], [0], [1], [0, 0, 1, 1], [], []>} : vector<8x8xbf16>, vector<8x16xbf16>, vector<8x16xf32> -> vector<8x16xf32>
    %44 = tpu.concatenate %25, %43 in 1 : vector<8x16xf32>, vector<8x16xf32> -> vector<8x32xf32>
    %45 = arith.truncf %44 : vector<8x32xf32> to vector<8x32xbf16>
    %c0_16 = arith.constant 0 : index
    %c0_17 = arith.constant 0 : index
    %c0_18 = arith.constant 0 : index
    %46 = vector.load %arg4[%c0_16, %c0_17, %c0_18] : memref<1x8x32xbf16, #tpu.memory_space<vmem>>, vector<1x8x32xbf16>
    %47 = vector.shape_cast %46 : vector<1x8x32xbf16> to vector<8x32xbf16>
    %48 = vector.shape_cast %45 : vector<8x32xbf16> to vector<1x8x32xbf16>
    tpu.vector_store %arg4[%c0_16, %c0_17, %c0_18], %48 {strides = array<i32>} : memref<1x8x32xbf16, #tpu.memory_space<vmem>>, vector<1x8x32xbf16>,
    return
  }
  func.func @transform_0(%arg0: i32, %arg1: i32) -> (i32, i32, i32) {
    %c0_i32 = arith.constant 0 : i32
    %c0_i32_0 = arith.constant 0 : i32
    %c0_i32_1 = arith.constant 0 : i32
    return %arg0, %c0_i32, %c0_i32_0 : i32, i32, i32
  }
  func.func @transform_1(%arg0: i32, %arg1: i32) -> (i32, i32, i32) {
    %c0_i32 = arith.constant 0 : i32
    %c0_i32_0 = arith.constant 0 : i32
    %c0_i32_1 = arith.constant 0 : i32
    return %arg0, %c0_i32, %c0_i32_0 : i32, i32, i32
  }
  func.func @transform_2(%arg0: i32, %arg1: i32) -> (i32, i32, i32) {
    %c0_i32 = arith.constant 0 : i32
    %c0_i32_0 = arith.constant 0 : i32
    return %arg0, %c0_i32, %arg1 : i32, i32, i32
  }
}

module attributes {stable_mosaic.version = 11 : i64} {
  func.func @kernel(%arg0: i32, %arg1: i32, %arg2: i32, %arg3: memref<16x32xbf16, #tpu.memory_space<vmem>>, %arg4: memref<32x64xbf16, #tpu.memory_space<vmem>>, %arg5: memref<1x64xf32, #tpu.memory_space<vmem>>, %arg6: memref<16x64xbf16, #tpu.memory_space<vmem>>, %arg7: memref<16x64xf32, #tpu.memory_space<vmem>>) attributes {dimension_semantics = [#tpu.dimension_semantics<parallel>, #tpu.dimension_semantics<parallel>, #tpu.dimension_semantics<arbitrary>], iteration_bounds = array<i64: 1, 1, 1>, scalar_prefetch = 0 : i64, scratch_operands = 1 : i64, tpu.core_type = #tpu.core_type<tc>, window_params = [{transform_indices = @transform_0, window_bounds = array<i64: 16, 32>}, {transform_indices = @transform_1, window_bounds = array<i64: 32, 64>}, {transform_indices = @transform_2, window_bounds = array<i64: 1, 64>}, {transform_indices = @transform_3, window_bounds = array<i64: 16, 64>}]} {
    %c0_i32 = arith.constant 0 : i32
    %0 = arith.cmpi eq, %arg2, %c0_i32 : i32
    %1 = arith.extui %0 : i1 to i32
    %c0_i32_0 = arith.constant 0 : i32
    %2 = arith.cmpi ne, %1, %c0_i32_0 : i32
    scf.if %2 {
      %cst_10 = arith.constant 0.000000e+00 : f32
      %12 = vector.broadcast %cst_10 : f32 to vector<16x64xf32>
      %c0_11 = arith.constant 0 : index
      %c0_12 = arith.constant 0 : index
      %13 = vector.load %arg7[%c0_11, %c0_12] : memref<16x64xf32, #tpu.memory_space<vmem>>, vector<16x64xf32>
      tpu.vector_store %arg7[%c0_11, %c0_12], %12 {strides = array<i32>} : memref<16x64xf32, #tpu.memory_space<vmem>>, vector<16x64xf32>,
    } else {
    }
    %c0 = arith.constant 0 : index
    %c0_1 = arith.constant 0 : index
    %3 = vector.load %arg7[%c0, %c0_1] : memref<16x64xf32, #tpu.memory_space<vmem>>, vector<16x64xf32>
    %c0_2 = arith.constant 0 : index
    %c0_3 = arith.constant 0 : index
    %4 = vector.load %arg3[%c0_2, %c0_3] : memref<16x32xbf16, #tpu.memory_space<vmem>>, vector<16x32xbf16>
    %c0_4 = arith.constant 0 : index
    %c0_5 = arith.constant 0 : index
    %5 = vector.load %arg4[%c0_4, %c0_5] : memref<32x64xbf16, #tpu.memory_space<vmem>>, vector<32x64xbf16>
    %cst = arith.constant dense<0.000000e+00> : vector<16x64xf32>
    %6 = tpu.matmul %4, %5, %cst {dimension_numbers = #tpu.dot_dimension_numbers<[1], [0], [0], [1], [0, 0, 1, 1], [], []>} : vector<16x32xbf16>, vector<32x64xbf16>, vector<16x64xf32> -> vector<16x64xf32>
    %7 = arith.addf %3, %6 : vector<16x64xf32>
    %c0_6 = arith.constant 0 : index
    %c0_7 = arith.constant 0 : index
    %8 = vector.load %arg7[%c0_6, %c0_7] : memref<16x64xf32, #tpu.memory_space<vmem>>, vector<16x64xf32>
    tpu.vector_store %arg7[%c0_6, %c0_7], %7 {strides = array<i32>} : memref<16x64xf32, #tpu.memory_space<vmem>>, vector<16x64xf32>,
    %c0_i32_8 = arith.constant 0 : i32
    %9 = arith.cmpi eq, %arg2, %c0_i32_8 : i32
    %10 = arith.extui %9 : i1 to i32
    %c0_i32_9 = arith.constant 0 : i32
    %11 = arith.cmpi ne, %10, %c0_i32_9 : i32
    scf.if %11 {
      %c0_10 = arith.constant 0 : index
      %c0_11 = arith.constant 0 : index
      %12 = vector.load %arg7[%c0_10, %c0_11] : memref<16x64xf32, #tpu.memory_space<vmem>>, vector<16x64xf32>
      %c0_12 = arith.constant 0 : index
      %c0_13 = arith.constant 0 : index
      %13 = vector.load %arg5[%c0_12, %c0_13] : memref<1x64xf32, #tpu.memory_space<vmem>>, vector<1x64xf32>
      %14 = vector.broadcast %13 : vector<1x64xf32> to vector<16x64xf32>
      %15 = arith.addf %12, %14 : vector<16x64xf32>
      %cst_14 = arith.constant 5.000000e-01 : f32
      %16 = vector.broadcast %cst_14 : f32 to vector<16x64xf32>
      %17 = arith.mulf %16, %15 : vector<16x64xf32>
      %cst_15 = arith.constant 4.471500e-02 : f32
      %18 = vector.broadcast %cst_15 : f32 to vector<16x64xf32>
      %19 = arith.mulf %18, %15 : vector<16x64xf32>
      %20 = arith.mulf %19, %15 : vector<16x64xf32>
      %21 = arith.mulf %20, %15 : vector<16x64xf32>
      %22 = arith.addf %15, %21 : vector<16x64xf32>
      %cst_16 = arith.constant 0.797884583 : f32
      %23 = vector.broadcast %cst_16 : f32 to vector<16x64xf32>
      %24 = arith.mulf %23, %22 : vector<16x64xf32>
      %25 = math.tanh %24 : vector<16x64xf32>
      %cst_17 = arith.constant 1.000000e+00 : f32
      %26 = vector.broadcast %cst_17 : f32 to vector<16x64xf32>
      %27 = arith.addf %26, %25 : vector<16x64xf32>
      %28 = arith.mulf %17, %27 : vector<16x64xf32>
      %29 = arith.truncf %28 : vector<16x64xf32> to vector<16x64xbf16>
      %c0_18 = arith.constant 0 : index
      %c0_19 = arith.constant 0 : index
      %30 = vector.load %arg6[%c0_18, %c0_19] : memref<16x64xbf16, #tpu.memory_space<vmem>>, vector<16x64xbf16>
      tpu.vector_store %arg6[%c0_18, %c0_19], %29 {strides = array<i32>} : memref<16x64xbf16, #tpu.memory_space<vmem>>, vector<16x64xbf16>,
    } else {
    }
    return
  }
  func.func @transform_0(%arg0: i32, %arg1: i32, %arg2: i32) -> (i32, i32) {
    %c0_i32 = arith.constant 0 : i32
    return %arg0, %arg2 : i32, i32
  }
  func.func @transform_1(%arg0: i32, %arg1: i32, %arg2: i32) -> (i32, i32) {
    %c0_i32 = arith.constant 0 : i32
    return %arg2, %arg1 : i32, i32
  }
  func.func @transform_2(%arg0: i32, %arg1: i32, %arg2: i32) -> (i32, i32) {
    %c0_i32 = arith.constant 0 : i32
    %c0_i32_0 = arith.constant 0 : i32
    return %c0_i32, %arg1 : i32, i32
  }
  func.func @transform_3(%arg0: i32, %arg1: i32, %arg2: i32) -> (i32, i32) {
    %c0_i32 = arith.constant 0 : i32
    return %arg0, %arg1 : i32, i32
  }
}

module attributes {stable_mosaic.version = 11 : i64} {
  func.func @_head_kernel(%arg0: i32, %arg1: memref<8x32xbf16, #tpu.memory_space<vmem>>, %arg2: memref<32x32xbf16, #tpu.memory_space<vmem>>, %arg3: memref<1x32xf32, #tpu.memory_space<vmem>>, %arg4: memref<32x128xbf16, #tpu.memory_space<vmem>>, %arg5: memref<1x128xf32, #tpu.memory_space<vmem>>, %arg6: memref<8x128xf32, #tpu.memory_space<vmem>>) attributes {dimension_semantics = [#tpu.dimension_semantics<arbitrary>], iteration_bounds = array<i64: 1>, scalar_prefetch = 0 : i64, scratch_operands = 0 : i64, tpu.core_type = #tpu.core_type<tc>, window_params = [{pipeline_mode = #tpu.pipeline_mode<synchronous>, transform_indices = @transform_0, window_bounds = array<i64: 8, 32>}, {pipeline_mode = #tpu.pipeline_mode<synchronous>, transform_indices = @transform_1, window_bounds = array<i64: 32, 32>}, {pipeline_mode = #tpu.pipeline_mode<synchronous>, transform_indices = @transform_2, window_bounds = array<i64: 1, 32>}, {pipeline_mode = #tpu.pipeline_mode<synchronous>, transform_indices = @transform_3, window_bounds = array<i64: 32, 128>}, {pipeline_mode = #tpu.pipeline_mode<synchronous>, transform_indices = @transform_4, window_bounds = array<i64: 1, 128>}, {pipeline_mode = #tpu.pipeline_mode<synchronous>, transform_indices = @transform_5, window_bounds = array<i64: 8, 128>}]} {
    %c0 = arith.constant 0 : index
    %c0_0 = arith.constant 0 : index
    %0 = vector.load %arg1[%c0, %c0_0] : memref<8x32xbf16, #tpu.memory_space<vmem>>, vector<8x32xbf16>
    %c0_1 = arith.constant 0 : index
    %c0_2 = arith.constant 0 : index
    %1 = vector.load %arg2[%c0_1, %c0_2] : memref<32x32xbf16, #tpu.memory_space<vmem>>, vector<32x32xbf16>
    %cst = arith.constant dense<0.000000e+00> : vector<8x32xf32>
    %2 = tpu.matmul %0, %1, %cst {dimension_numbers = #tpu.dot_dimension_numbers<[1], [0], [0], [1], [0, 0, 1, 1], [], []>} : vector<8x32xbf16>, vector<32x32xbf16>, vector<8x32xf32> -> vector<8x32xf32>
    %c0_3 = arith.constant 0 : index
    %c0_4 = arith.constant 0 : index
    %3 = vector.load %arg3[%c0_3, %c0_4] : memref<1x32xf32, #tpu.memory_space<vmem>>, vector<1x32xf32>
    %4 = vector.broadcast %3 : vector<1x32xf32> to vector<8x32xf32>
    %5 = arith.addf %2, %4 : vector<8x32xf32>
    %6 = math.tanh %5 : vector<8x32xf32>
    %7 = arith.truncf %6 : vector<8x32xf32> to vector<8x32xbf16>
    %c0_5 = arith.constant 0 : index
    %c0_6 = arith.constant 0 : index
    %8 = vector.load %arg4[%c0_5, %c0_6] : memref<32x128xbf16, #tpu.memory_space<vmem>>, vector<32x128xbf16>
    %cst_7 = arith.constant dense<0.000000e+00> : vector<8x128xf32>
    %9 = tpu.matmul %7, %8, %cst_7 {dimension_numbers = #tpu.dot_dimension_numbers<[1], [0], [0], [1], [0, 0, 1, 1], [], []>} : vector<8x32xbf16>, vector<32x128xbf16>, vector<8x128xf32> -> vector<8x128xf32>
    %c0_8 = arith.constant 0 : index
    %c0_9 = arith.constant 0 : index
    %10 = vector.load %arg5[%c0_8, %c0_9] : memref<1x128xf32, #tpu.memory_space<vmem>>, vector<1x128xf32>
    %11 = vector.broadcast %10 : vector<1x128xf32> to vector<8x128xf32>
    %12 = arith.addf %9, %11 : vector<8x128xf32>
    %c0_10 = arith.constant 0 : index
    %c0_11 = arith.constant 0 : index
    %13 = vector.load %arg6[%c0_10, %c0_11] : memref<8x128xf32, #tpu.memory_space<vmem>>, vector<8x128xf32>
    tpu.vector_store %arg6[%c0_10, %c0_11], %12 {strides = array<i32>} : memref<8x128xf32, #tpu.memory_space<vmem>>, vector<8x128xf32>,
    return
  }
  func.func @transform_0(%arg0: i32) -> (i32, i32) {
    %c0_i32 = arith.constant 0 : i32
    %c0_i32_0 = arith.constant 0 : i32
    %c0_i32_1 = arith.constant 0 : i32
    return %c0_i32, %c0_i32_0 : i32, i32
  }
  func.func @transform_1(%arg0: i32) -> (i32, i32) {
    %c0_i32 = arith.constant 0 : i32
    %c0_i32_0 = arith.constant 0 : i32
    %c0_i32_1 = arith.constant 0 : i32
    return %c0_i32, %c0_i32_0 : i32, i32
  }
  func.func @transform_2(%arg0: i32) -> (i32, i32) {
    %c0_i32 = arith.constant 0 : i32
    %c0_i32_0 = arith.constant 0 : i32
    %c0_i32_1 = arith.constant 0 : i32
    return %c0_i32, %c0_i32_0 : i32, i32
  }
  func.func @transform_3(%arg0: i32) -> (i32, i32) {
    %c0_i32 = arith.constant 0 : i32
    %c0_i32_0 = arith.constant 0 : i32
    %c0_i32_1 = arith.constant 0 : i32
    return %c0_i32, %c0_i32_0 : i32, i32
  }
  func.func @transform_4(%arg0: i32) -> (i32, i32) {
    %c0_i32 = arith.constant 0 : i32
    %c0_i32_0 = arith.constant 0 : i32
    %c0_i32_1 = arith.constant 0 : i32
    return %c0_i32, %c0_i32_0 : i32, i32
  }
  func.func @transform_5(%arg0: i32) -> (i32, i32) {
    %c0_i32 = arith.constant 0 : i32
    %c0_i32_0 = arith.constant 0 : i32
    %c0_i32_1 = arith.constant 0 : i32
    return %c0_i32, %c0_i32_0 : i32, i32
  }
}

module attributes {stable_mosaic.version = 11 : i64} {
  func.func @kernel(%arg0: i32, %arg1: i32, %arg2: i32, %arg3: memref<16x64xbf16, #tpu.memory_space<vmem>>, %arg4: memref<64x32xbf16, #tpu.memory_space<vmem>>, %arg5: memref<1x32xf32, #tpu.memory_space<vmem>>, %arg6: memref<16x32xbf16, #tpu.memory_space<vmem>>, %arg7: memref<1x32xf32, #tpu.memory_space<vmem>>, %arg8: memref<1x32xf32, #tpu.memory_space<vmem>>, %arg9: memref<16x32xbf16, #tpu.memory_space<vmem>>, %arg10: memref<16x32xf32, #tpu.memory_space<vmem>>) attributes {dimension_semantics = [#tpu.dimension_semantics<parallel>, #tpu.dimension_semantics<parallel>, #tpu.dimension_semantics<arbitrary>], iteration_bounds = array<i64: 1, 1, 1>, scalar_prefetch = 0 : i64, scratch_operands = 1 : i64, tpu.core_type = #tpu.core_type<tc>, window_params = [{transform_indices = @transform_0, window_bounds = array<i64: 16, 64>}, {transform_indices = @transform_1, window_bounds = array<i64: 64, 32>}, {transform_indices = @transform_2, window_bounds = array<i64: 1, 32>}, {transform_indices = @transform_3, window_bounds = array<i64: 16, 32>}, {transform_indices = @transform_4, window_bounds = array<i64: 1, 32>}, {transform_indices = @transform_5, window_bounds = array<i64: 1, 32>}, {transform_indices = @transform_6, window_bounds = array<i64: 16, 32>}]} {
    %c0_i32 = arith.constant 0 : i32
    %0 = arith.cmpi eq, %arg2, %c0_i32 : i32
    %1 = arith.extui %0 : i1 to i32
    %c0_i32_0 = arith.constant 0 : i32
    %2 = arith.cmpi ne, %1, %c0_i32_0 : i32
    scf.if %2 {
      %cst_10 = arith.constant 0.000000e+00 : f32
      %12 = vector.broadcast %cst_10 : f32 to vector<16x32xf32>
      %c0_11 = arith.constant 0 : index
      %c0_12 = arith.constant 0 : index
      %13 = vector.load %arg10[%c0_11, %c0_12] : memref<16x32xf32, #tpu.memory_space<vmem>>, vector<16x32xf32>
      tpu.vector_store %arg10[%c0_11, %c0_12], %12 {strides = array<i32>} : memref<16x32xf32, #tpu.memory_space<vmem>>, vector<16x32xf32>,
    } else {
    }
    %c0 = arith.constant 0 : index
    %c0_1 = arith.constant 0 : index
    %3 = vector.load %arg10[%c0, %c0_1] : memref<16x32xf32, #tpu.memory_space<vmem>>, vector<16x32xf32>
    %c0_2 = arith.constant 0 : index
    %c0_3 = arith.constant 0 : index
    %4 = vector.load %arg3[%c0_2, %c0_3] : memref<16x64xbf16, #tpu.memory_space<vmem>>, vector<16x64xbf16>
    %c0_4 = arith.constant 0 : index
    %c0_5 = arith.constant 0 : index
    %5 = vector.load %arg4[%c0_4, %c0_5] : memref<64x32xbf16, #tpu.memory_space<vmem>>, vector<64x32xbf16>
    %cst = arith.constant dense<0.000000e+00> : vector<16x32xf32>
    %6 = tpu.matmul %4, %5, %cst {dimension_numbers = #tpu.dot_dimension_numbers<[1], [0], [0], [1], [0, 0, 1, 1], [], []>} : vector<16x64xbf16>, vector<64x32xbf16>, vector<16x32xf32> -> vector<16x32xf32>
    %7 = arith.addf %3, %6 : vector<16x32xf32>
    %c0_6 = arith.constant 0 : index
    %c0_7 = arith.constant 0 : index
    %8 = vector.load %arg10[%c0_6, %c0_7] : memref<16x32xf32, #tpu.memory_space<vmem>>, vector<16x32xf32>
    tpu.vector_store %arg10[%c0_6, %c0_7], %7 {strides = array<i32>} : memref<16x32xf32, #tpu.memory_space<vmem>>, vector<16x32xf32>,
    %c0_i32_8 = arith.constant 0 : i32
    %9 = arith.cmpi eq, %arg2, %c0_i32_8 : i32
    %10 = arith.extui %9 : i1 to i32
    %c0_i32_9 = arith.constant 0 : i32
    %11 = arith.cmpi ne, %10, %c0_i32_9 : i32
    scf.if %11 {
      %c0_10 = arith.constant 0 : index
      %c0_11 = arith.constant 0 : index
      %12 = vector.load %arg10[%c0_10, %c0_11] : memref<16x32xf32, #tpu.memory_space<vmem>>, vector<16x32xf32>
      %c0_12 = arith.constant 0 : index
      %c0_13 = arith.constant 0 : index
      %13 = vector.load %arg5[%c0_12, %c0_13] : memref<1x32xf32, #tpu.memory_space<vmem>>, vector<1x32xf32>
      %14 = vector.broadcast %13 : vector<1x32xf32> to vector<16x32xf32>
      %15 = arith.addf %12, %14 : vector<16x32xf32>
      %c0_14 = arith.constant 0 : index
      %c0_15 = arith.constant 0 : index
      %16 = vector.load %arg6[%c0_14, %c0_15] : memref<16x32xbf16, #tpu.memory_space<vmem>>, vector<16x32xbf16>
      %17 = arith.extf %16 : vector<16x32xbf16> to vector<16x32xf32>
      %18 = arith.addf %15, %17 : vector<16x32xf32>
      %cst_16 = arith.constant dense<0.000000e+00> : vector<16xf32>
      %19 = vector.multi_reduction <add>, %18, %cst_16 [1] : vector<16x32xf32> to vector<16xf32>
      %20 = vector.shape_cast %19 : vector<16xf32> to vector<16x1xf32>
      %cst_17 = arith.constant 3.200000e+01 : f32
      %21 = vector.broadcast %cst_17 : f32 to vector<16x1xf32>
      %22 = arith.divf %20, %21 : vector<16x1xf32>
      %23 = vector.broadcast %22 : vector<16x1xf32> to vector<16x32xf32>
      %24 = arith.subf %18, %23 : vector<16x32xf32>
      %25 = arith.mulf %24, %24 : vector<16x32xf32>
      %cst_18 = arith.constant dense<0.000000e+00> : vector<16xf32>
      %26 = vector.multi_reduction <add>, %25, %cst_18 [1] : vector<16x32xf32> to vector<16xf32>
      %27 = vector.shape_cast %26 : vector<16xf32> to vector<16x1xf32>
      %cst_19 = arith.constant 3.200000e+01 : f32
      %28 = vector.broadcast %cst_19 : f32 to vector<16x1xf32>
      %29 = arith.divf %27, %28 : vector<16x1xf32>
      %30 = vector.broadcast %22 : vector<16x1xf32> to vector<16x32xf32>
      %31 = arith.subf %18, %30 : vector<16x32xf32>
      %cst_20 = arith.constant 9.99999996E-13 : f32
      %32 = vector.broadcast %cst_20 : f32 to vector<16x1xf32>
      %33 = arith.addf %29, %32 : vector<16x1xf32>
      %34 = math.rsqrt %33 : vector<16x1xf32>
      %35 = vector.broadcast %34 : vector<16x1xf32> to vector<16x32xf32>
      %36 = arith.mulf %31, %35 : vector<16x32xf32>
      %c0_21 = arith.constant 0 : index
      %c0_22 = arith.constant 0 : index
      %37 = vector.load %arg7[%c0_21, %c0_22] : memref<1x32xf32, #tpu.memory_space<vmem>>, vector<1x32xf32>
      %38 = vector.broadcast %37 : vector<1x32xf32> to vector<16x32xf32>
      %39 = arith.mulf %36, %38 : vector<16x32xf32>
      %c0_23 = arith.constant 0 : index
      %c0_24 = arith.constant 0 : index
      %40 = vector.load %arg8[%c0_23, %c0_24] : memref<1x32xf32, #tpu.memory_space<vmem>>, vector<1x32xf32>
      %41 = vector.broadcast %40 : vector<1x32xf32> to vector<16x32xf32>
      %42 = arith.addf %39, %41 : vector<16x32xf32>
      %43 = arith.truncf %42 : vector<16x32xf32> to vector<16x32xbf16>
      %c0_25 = arith.constant 0 : index
      %c0_26 = arith.constant 0 : index
      %44 = vector.load %arg9[%c0_25, %c0_26] : memref<16x32xbf16, #tpu.memory_space<vmem>>, vector<16x32xbf16>
      tpu.vector_store %arg9[%c0_25, %c0_26], %43 {strides = array<i32>} : memref<16x32xbf16, #tpu.memory_space<vmem>>, vector<16x32xbf16>,
    } else {
    }
    return
  }
  func.func @transform_0(%arg0: i32, %arg1: i32, %arg2: i32) -> (i32, i32) {
    %c0_i32 = arith.constant 0 : i32
    return %arg0, %arg2 : i32, i32
  }
  func.func @transform_1(%arg0: i32, %arg1: i32, %arg2: i32) -> (i32, i32) {
    %c0_i32 = arith.constant 0 : i32
    return %arg2, %arg1 : i32, i32
  }
  func.func @transform_2(%arg0: i32, %arg1: i32, %arg2: i32) -> (i32, i32) {
    %c0_i32 = arith.constant 0 : i32
    %c0_i32_0 = arith.constant 0 : i32
    return %c0_i32, %arg1 : i32, i32
  }
  func.func @transform_3(%arg0: i32, %arg1: i32, %arg2: i32) -> (i32, i32) {
    %c0_i32 = arith.constant 0 : i32
    return %arg0, %arg1 : i32, i32
  }
  func.func @transform_4(%arg0: i32, %arg1: i32, %arg2: i32) -> (i32, i32) {
    %c0_i32 = arith.constant 0 : i32
    %c0_i32_0 = arith.constant 0 : i32
    return %c0_i32, %arg1 : i32, i32
  }
  func.func @transform_5(%arg0: i32, %arg1: i32, %arg2: i32) -> (i32, i32) {
    %c0_i32 = arith.constant 0 : i32
    %c0_i32_0 = arith.constant 0 : i32
    return %c0_i32, %arg1 : i32, i32
  }
  func.func @transform_6(%arg0: i32, %arg1: i32, %arg2: i32) -> (i32, i32) {
    %c0_i32 = arith.constant 0 : i32
    return %arg0, %arg1 : i32, i32
  }
}

</mosaic_0001>

<llo_original>
// kernel: fwd.13
$region0: #{fwd.13}
  #allocation0 [shape = 'u32[]', space=smem, size = 0x4, offset = 0x4, fixed_abs, tag = 'smem constant byte address 0x4 - core index']
  #allocation1 [shape = 'u32[72,128]{1,0:T(1,128)}', space=vmem, size = 0x9000, scoped, tag = 'internal scratch']
  #allocation2 [shape = 'f32[16,96]{1,0:T(8,128)}', space=vmem, size = 0x2000, scoped, tag = 'scratch operand']
  %s0 = inlined_call_operand.vmem [shape: bf16[16,32], index: 0, kind: input, shape index: {}]
  %s1 = inlined_call_operand.vmem [shape: bf16[32,96], index: 1, kind: input, shape index: {}]
  %s2 = inlined_call_operand.vmem [shape: f32[1,96], index: 2, kind: input, shape index: {}]
  %s3 = inlined_call_operand.vmem [shape: bf16[16,96], index: 3, kind: output, shape index: {}]
  %s4 = sld [smem:[#allocation0]]
  $region30: #{fwd.13} parent=0
    _
  %s6 = ssub.s32 1, %s4
  %s7 = scalar_select 0, %s6, %s4
  // Predicated region
  $region2: #{fwd.13} parent=0 // pred_check
    _
  $region3: #{fwd.13} parent=0 // pred_check_branch
    %9 = sbr.rel (0) target = $region5
  $region4: #{fwd.13} parent=0 // pred_region
    _
  $region5: #{fwd.13} parent=0 // pred_fallthru
    _
  // Predicated region
  $region6: #{fwd.13} parent=0 // pred_check
    _
  $region7: #{fwd.13} parent=0 // pred_check_branch
    %11 = sbr.rel (0) target = $region9
  $region8: #{fwd.13} parent=0 // pred_region
    _
  $region9: #{fwd.13} parent=0 // pred_fallthru
    _
  // Predicated region
  $region10: #{fwd.13} parent=0 // pred_check
    _
  $region11: #{fwd.13} parent=0 // pred_check_branch
    %13 = sbr.rel (0) target = $region13
  $region12: #{fwd.13} parent=0 // pred_region
    _
  $region13: #{fwd.13} parent=0 // pred_fallthru
    _
  %p15 = scmp.eq.s32.totalorder 0, 0
  // Predicated region
  $region14: #{fwd.13} parent=0 // pred_check
    %p16 = pneg %p15
  $region15: #{fwd.13} parent=0 // pred_check_branch
    %18 = sbr.rel (%p16) target = $region17
  $region16: #{fwd.13} parent=0 // pred_region
    %vm19 = vcmask 785408
    %20 = vst.msk [vmem:[#allocation2] sm:$0xff] %vm19, 0.0
    %21 = vst.msk [vmem:[#allocation2 + $0x8] sm:$0xff] %vm19, 0.0
  $region17: #{fwd.13} parent=0 // pred_fallthru
    _
  %v22 = vld [vmem:[#allocation2] sm:$0xff]
  %v23 = vld [vmem:[#allocation2 + $0x8] sm:$0xff]
  %v24 = vld [vmem:[%s0] sm:$0xf]
  %v25 = vld [vmem:[%s0 + $0x4] sm:$0xf]
  %v26 = vld [vmem:[%s1] sm:$0xf]
  %v27 = vld [vmem:[%s1 + $0x4] sm:$0xf]
  %v28 = vld [vmem:[%s1 + $0x8] sm:$0xf]
  %v29 = vld [vmem:[%s1 + $0xc] sm:$0xf]
  %v32 = vunpack.c.l.b16 %v24
  %v33 = vunpack.c.l.b16 %v25
  %v34 = vpack.c.b16 %v33, %v32
  %v39 = vunpack.c.l.b16 %v26
  %v40 = vunpack.c.l.b16 %v27
  %v41 = vunpack.c.l.b16 %v28
  %v42 = vunpack.c.l.b16 %v29
  %v43 = vpack.c.b16 %v40, %v39
  %v44 = vpack.c.b16 %v42, %v41
  %vm47 = vcmask 261120
  %v49 = vsel %vm47, %v34, 0
  %51 = vmatpush.bf16.msra.mxu0 0
  %52 = vmatpush.bf16.msra.mxu0 0
  %53 = vmatpush.bf16.msra.mxu0 0
  %54 = vmatpush.bf16.msra.mxu0 0
  %55 = vmatpush.bf16.msra.mxu0 0
  %56 = vmatpush.bf16.msra.mxu0 0
  %57 = vmatpush.bf16.msra.mxu0 %v44
  %58 = vmatpush.bf16.msra.mxu0 %v43
  %59 = vmatmul.bf16.gmra.mxu0 %v49
  %v60 = vpop.f32.mrf.mxu0
  %v61 = vadd.f32 0.0, %v60
  %v62 = vpop.f32.mrf.mxu0
  %v63 = vadd.f32 0.0, %v62
  %64 = vdwg.mxu0
  %v65 = vadd.f32 %v22, %v61
  %v66 = vadd.f32 %v23, %v63
  %vm67 = vcmask 785408
  %68 = vst.msk [vmem:[#allocation2] sm:$0xff] %vm67, %v65
  %69 = vst.msk [vmem:[#allocation2 + $0x8] sm:$0xff] %vm67, %v66
  // Predicated region
  $region18: #{fwd.13} parent=0 // pred_check
    %p70 = pneg %p15
  $region19: #{fwd.13} parent=0 // pred_check_branch
    %72 = sbr.rel (%p70) target = $region21
  $region20: #{fwd.13} parent=0 // pred_region
    %v73 = vld [vmem:[#allocation2] sm:$0xff]
    %v74 = vld [vmem:[#allocation2 + $0x8] sm:$0xff]
    %v75 = vld [vmem:[%s2] sm:$0x1]
    %v77 = vperm.slane %v75, 0
    %v79 = vadd.f32 %v73, %v77
    %v80 = vadd.f32 %v74, %v77
    %v81 = vpack.c.bf16 %v79, %v79
    %v82 = vpack.c.bf16 %v80, %v80
    %vm83 = vcmask 781312
    %84 = vst.msk [vmem:[%s3] sm:$0xf] %vm83, %v81
    %85 = vst.msk [vmem:[%s3 + $0x4] sm:$0xf] %vm83, %v82
  $region21: #{fwd.13} parent=0 // pred_fallthru
    _
  // Predicated region
  $region22: #{fwd.13} parent=0 // pred_check
    _
  $region23: #{fwd.13} parent=0 // pred_check_branch
    %87 = sbr.rel (0) target = $region25
  $region24: #{fwd.13} parent=0 // pred_region
    _
  $region25: #{fwd.13} parent=0 // pred_fallthru
    _
  // Predicated region
  $region26: #{fwd.13} parent=0 // pred_check
    _
  $region27: #{fwd.13} parent=0 // pred_check_branch
    %89 = sbr.rel (0) target = $region29
  $region28: #{fwd.13} parent=0 // pred_region
    _
  $region29: #{fwd.13} parent=0 // pred_fallthru
    _

// kernel: fwd.14
$region0: #{fwd.14}
  #allocation0 [shape = 'u32[]', space=smem, size = 0x4, offset = 0x4, fixed_abs, tag = 'smem constant byte address 0x4 - core index']
  #allocation1 [shape = 'u32[72,128]{1,0:T(1,128)}', space=vmem, size = 0x9000, scoped, tag = 'internal scratch']
  %s0 = inlined_call_operand.vmem [shape: bf16[2,8,96], index: 0, kind: input, shape index: {}]
  %s1 = inlined_call_operand.vmem [shape: f32[2,1,8], index: 1, kind: input, shape index: {}]
  %s2 = inlined_call_operand.vmem [shape: bf16[2,8,32], index: 2, kind: output, shape index: {}]
  %s3 = sld [smem:[#allocation0]]
  $region41: #{fwd.14} parent=0
    _
  %s5 = ssub.s32 1, %s3
  %s6 = scalar_select 0, %s5, %s3
  loop: start=0, step=1, limit=4
  $region2: #{fwd.14} parent=0 // loop_pre_header
    _
  $region3: #{fwd.14} parent=0 // loop_header
    %s8 = sphi 0, %s12
    %p9 = scmp.ge.s32.totalorder %s8, 4
    %s15 = sphi 0, %s27
    %s16 = sphi 0, %s23
    %s17 = sphi 0, %s15
    %s18 = sphi 0, %s16
    %s19 = sphi 0, %s17
    %s20 = sphi 0, %s18
    %s30 = sphi 0, %s32
    %s33 = sphi 0, %s30
    %s34 = sphi 0, %s33
    %s50 = sphi 0, %s34
    %s56 = sphi 0, %s58
    %s59 = sphi 0, %s56
    %s60 = sphi 0, %s59
    %s76 = sphi 0, %s60
    %s84 = sphi 0, %s86
    %s87 = sphi 0, %s84
    %s88 = sphi 0, %s87
    %s104 = sphi 0, %s88
  $region4: #{fwd.14} parent=0 // loop_header_branch
    %11 = sbr.rel (%p9) target = $region8
  $region5: #{fwd.14} parent=0 // loop_body
    %s13 = ssub.s32 %s8, 1
    %s14 = ssub.s32 %s8, 2
    %s21 = sadd.s32 1, %s16
    %p22 = scmp.ge.s32.totalorder %s21, 1
    %s23 = scalar_select %p22, 0, %s21
    %s24 = sadd.s32 1, %s15
    %s25 = scalar_select %p22, %s24, %s15
    %p26 = scmp.ge.s32.totalorder %s25, 2
    %s27 = scalar_select %p26, 0, %s25
    %s28 = ssub.s32 %s15, %s27
    %p29 = scmp.eq.s32.totalorder %s28, 0
    %s31 = sadd.s32 %s30, 1
    %s32 = scalar_select %p29, %s30, %s31
    %p35 = pneg %p29
    %p36 = scmp.eq.s32.totalorder %s8, 1
    %p37 = por %p35, %p36
    %p38 = scmp.ne.s32.totalorder %s30, %s33
    %p39 = scmp.eq.s32.totalorder %s8, 0
    %p40 = por %p38, %p39
    %p41 = scmp.ne.s32.totalorder %s30, %s33
    %p42 = scmp.eq.s32.totalorder %s13, 1
    %p43 = por %p41, %p42
    %p44 = scmp.ne.s32.totalorder %s33, %s34
    %p45 = scmp.eq.s32.totalorder %s13, 0
    %p46 = por %p44, %p45
    %p47 = scmp.ne.s32.totalorder %s33, %s34
    %p48 = scmp.eq.s32.totalorder %s14, 1
    %p49 = por %p47, %p48
    %p51 = scmp.ne.s32.totalorder %s34, %s50
    %p52 = scmp.eq.s32.totalorder %s14, 0
    %p53 = por %p51, %p52
    %s54 = ssub.s32 %s15, %s27
    %p55 = scmp.eq.s32.totalorder %s54, 0
    %s57 = sadd.s32 %s56, 1
    %s58 = scalar_select %p55, %s56, %s57
    %p61 = pneg %p55
    %p62 = scmp.eq.s32.totalorder %s8, 1
    %p63 = por %p61, %p62
    %p64 = scmp.ne.s32.totalorder %s56, %s59
    %p65 = scmp.eq.s32.totalorder %s8, 0
    %p66 = por %p64, %p65
    %p67 = scmp.ne.s32.totalorder %s56, %s59
    %p68 = scmp.eq.s32.totalorder %s13, 1
    %p69 = por %p67, %p68
    %p70 = scmp.ne.s32.totalorder %s59, %s60
    %p71 = scmp.eq.s32.totalorder %s13, 0
    %p72 = por %p70, %p71
    %p73 = scmp.ne.s32.totalorder %s59, %s60
    %p74 = scmp.eq.s32.totalorder %s14, 1
    %p75 = por %p73, %p74
    %p77 = scmp.ne.s32.totalorder %s60, %s76
    %p78 = scmp.eq.s32.totalorder %s14, 0
    %p79 = por %p77, %p78
    %s80 = ssub.s32 %s15, %s27
    %s81 = ssub.s32 %s16, %s23
    %s82 = sor.u32 %s80, %s81
    %p83 = scmp.eq.s32.totalorder %s82, 0
    %s85 = sadd.s32 %s84, 1
    %s86 = scalar_select %p83, %s84, %s85
    %p89 = pneg %p83
    %p90 = scmp.eq.s32.totalorder %s8, 1
    %p91 = por %p89, %p90
    %p92 = scmp.ne.s32.totalorder %s84, %s87
    %p93 = scmp.eq.s32.totalorder %s8, 0
    %p94 = por %p92, %p93
    %p95 = scmp.ne.s32.totalorder %s84, %s87
    %p96 = scmp.eq.s32.totalorder %s13, 1
    %p97 = por %p95, %p96
    %p98 = scmp.ne.s32.totalorder %s87, %s88
    %p99 = scmp.eq.s32.totalorder %s13, 0
    %p100 = por %p98, %p99
    %p101 = scmp.ne.s32.totalorder %s87, %s88
    %p102 = scmp.eq.s32.totalorder %s14, 1
    %p103 = por %p101, %p102
    %p105 = scmp.ne.s32.totalorder %s88, %s104
    %p106 = scmp.eq.s32.totalorder %s14, 0
    %p107 = por %p105, %p106
    %p108 = scmp.le.s32.totalorder 1, %s8
    %p109 = scmp.lt.s32.totalorder %s8, 3
    %p110 = pnand %p108, %p109
    %p111 = pneg %p110
    // Predicated region
    $region9: #{fwd.14} parent=5 // pred_check
      _
    $region10: #{fwd.14} parent=5 // pred_check_branch
      %113 = sbr.rel (%p110) target = $region12
    $region11: #{fwd.14} parent=5 // pred_region
      %s114 = ssub.s32 %s8, 1
    $region12: #{fwd.14} parent=5 // pred_fallthru
      _
    %p115 = scmp.lt.s32.totalorder %s8, 2
    // Predicated region
    $region13: #{fwd.14} parent=5 // pred_check
      %p116 = pneg %p115
    $region14: #{fwd.14} parent=5 // pred_check_branch
      %118 = sbr.rel (%p116) target = $region16
    $region15: #{fwd.14} parent=5 // pred_region
      // Predicated region
      $region17: #{fwd.14} parent=15 // pred_check
        %p119 = pneg %p40
      $region18: #{fwd.14} parent=15 // pred_check_branch
        %121 = sbr.rel (%p119) target = $region20
      $region19: #{fwd.14} parent=15 // pred_region
        %p122 = scmp.lt.s32.totalorder %s15, 1
        %s123 = scalar_select %p122, %s15, 1
        %s124 = smul.addr %s123, 4
        %s125 = scalar_lea.vmem %s0, %s124
      $region20: #{fwd.14} parent=15 // pred_fallthru
        _
      // Predicated region
      $region21: #{fwd.14} parent=15 // pred_check
        %p126 = pneg %p66
      $region22: #{fwd.14} parent=15 // pred_check_branch
        %128 = sbr.rel (%p126) target = $region24
      $region23: #{fwd.14} parent=15 // pred_region
        %p129 = scmp.lt.s32.totalorder %s15, 1
        %s130 = scalar_select %p129, %s15, 1
        %s131 = scalar_lea.vmem %s1, %s130
      $region24: #{fwd.14} parent=15 // pred_fallthru
        _
    $region16: #{fwd.14} parent=5 // pred_fallthru
      _
    %p132 = scmp.le.s32.totalorder 1, %s8
    %p133 = scmp.lt.s32.totalorder %s8, 3
    %p134 = pnand %p132, %p133
    %p135 = pneg %p134
    // Predicated region
    $region25: #{fwd.14} parent=5 // pred_check
      _
    $region26: #{fwd.14} parent=5 // pred_check_branch
      %137 = sbr.rel (%p134) target = $region28
    $region27: #{fwd.14} parent=5 // pred_region
      %s138 = ssub.s32 %s8, 1
      %p139 = scmp.lt.s32.totalorder %s17, 1
      %s140 = scalar_select %p139, %s17, 1
      %s141 = smul.addr %s140, 4
      %s142 = scalar_lea.vmem %s0, %s141
      %p143 = pneg %p46
      %p144 = pneg %p43
      %p145 = scmp.lt.s32.totalorder %s17, 1
      %s146 = scalar_select %p145, %s17, 1
      %s147 = scalar_lea.vmem %s1, %s146
      %p148 = pneg %p72
      %p149 = pneg %p69
      %p150 = pneg %p100
      %p151 = pneg %p97
      %p152 = scmp.lt.s32.totalorder %s17, 1
      %s153 = scalar_select %p152, %s17, 1
      %p154 = scmp.lt.s32.totalorder %s18, 0
      %s155 = scalar_select %p154, %s18, 0
      %s156 = sadd.s32 %s155, %s153
      %s157 = smul.addr %s156, 4
      %s158 = scalar_lea.vmem %s2, %s157
      %p159 = scmp.lt.s32.totalorder %s17, 1
      %s160 = scalar_select %p159, %s17, 1
      %s161 = smul.addr %s160, 4
      %s162 = scalar_lea.vmem %s0, %s161
      %p163 = scmp.lt.s32.totalorder %s17, 1
      %s164 = scalar_select %p163, %s17, 1
      %s165 = scalar_lea.vmem %s1, %s164
      %p166 = scmp.lt.s32.totalorder %s17, 1
      %s167 = scalar_select %p166, %s17, 1
      %p168 = scmp.lt.s32.totalorder %s18, 0
      %s169 = scalar_select %p168, %s18, 0
      %s170 = sadd.s32 %s169, %s167
      %s171 = smul.addr %s170, 4
      %s172 = scalar_lea.vmem %s2, %s171
      %v174 = vld [vmem:[%s165] sm:$0x1]
      %v175 = vld [vmem:[%s162] sm:$0xf]
      %v177 = vperm.slane %v174, 0
      %v180 = vunpack.c.l.b16 %v175
      %v181 = vpack.c.b16 %v180, %v180
      %182 = vrot.lane.b32.xlu0 %v181, 96
      %v183 = vpop.permute.xlu0 %182
      %vm184 = vcmask 130048
      %v186 = vsel %vm184, %v175, 0
      %v189 = vsel %vm184, %v183, 0
      %191 = vmatpush.bf16.xpose.msra.mxu0 0
      %192 = vmatpush.bf16.xpose.msra.mxu0 0
      %193 = vmatpush.bf16.xpose.msra.mxu0 0
      %194 = vmatpush.bf16.xpose.msra.mxu0 0
      %195 = vmatpush.bf16.xpose.msra.mxu0 0
      %196 = vmatpush.bf16.xpose.msra.mxu0 0
      %197 = vmatpush.bf16.xpose.msra.mxu0 0
      %198 = vmatpush.bf16.xpose.msra.mxu0 %v189
      %199 = vmatmul.bf16.gmra.mxu0 %v186
      %v200 = vpop.f32.mrf.mxu0
      %v201 = vadd.f32 %v177, %v200
      %v202 = vpop.f32.mrf.mxu0
      %203 = vdwg.mxu0
      %vm204 = vcmask 64512
      %v205 = vsel %vm204, %v201, -inf
      %206 = vmax.xlane.f32.xlu0 %v205
      %v207 = vpop.xlane.xlu0 %206
      %v208 = vsub.f32 %v201, %v207
      %v209 = vmul.f32 %v208, 1.442695
      %v210 = vpow.pop %v209
      %v211 = vsel %vm204, %v210, 0.0
      %212 = vadd.xlane.f32.xlu0 %v211
      %v213 = vpop.xlane.xlu0 %212
      %v214 = vrcp.pop %v213
      %v215 = vmul.f32 %v210, %v214
      %v216 = vpack.c.bf16 %v215, %v215
      %217 = vrot.lane.b32.xlu0 %v181, 64
      %v218 = vpop.permute.xlu0 %217
      %v220 = vsel %vm204, %v216, 0
      %vm222 = vcmask 1043456
      %v224 = vsel %vm222, %v218, 0
      %226 = vmatpush.bf16.msra.mxu0 0
      %227 = vmatpush.bf16.msra.mxu0 0
      %228 = vmatpush.bf16.msra.mxu0 0
      %229 = vmatpush.bf16.msra.mxu0 0
      %230 = vmatpush.bf16.msra.mxu0 0
      %231 = vmatpush.bf16.msra.mxu0 0
      %232 = vmatpush.bf16.msra.mxu0 0
      %233 = vmatpush.bf16.msra.mxu0 %v224
      %234 = vmatmul.bf16.gmra.mxu0 %v220
      %v235 = vpop.f32.mrf.mxu0
      %v236 = vadd.f32 0.0, %v235
      %v237 = vpop.f32.mrf.mxu0
      %238 = vdwg.mxu0
      %239 = vrot.lane.b32.xlu0 %v181, 112
      %v240 = vpop.permute.xlu0 %239
      %241 = vrot.lane.b32.xlu0 %v181, 80
      %v242 = vpop.permute.xlu0 %241
      %v244 = vsel %vm184, %v240, 0
      %v247 = vsel %vm184, %v242, 0
      %249 = vmatpush.bf16.xpose.msra.mxu0 0
      %250 = vmatpush.bf16.xpose.msra.mxu0 0
      %251 = vmatpush.bf16.xpose.msra.mxu0 0
      %252 = vmatpush.bf16.xpose.msra.mxu0 0
      %253 = vmatpush.bf16.xpose.msra.mxu0 0
      %254 = vmatpush.bf16.xpose.msra.mxu0 0
      %255 = vmatpush.bf16.xpose.msra.mxu0 0
      %256 = vmatpush.bf16.xpose.msra.mxu0 %v247
      %257 = vmatmul.bf16.gmra.mxu0 %v244
      %v258 = vpop.f32.mrf.mxu0
      %v259 = vadd.f32 %v177, %v258
      %v260 = vpop.f32.mrf.mxu0
      %261 = vdwg.mxu0
      %v262 = vsel %vm204, %v259, -inf
      %263 = vmax.xlane.f32.xlu0 %v262
      %v264 = vpop.xlane.xlu0 %263
      %v265 = vsub.f32 %v259, %v264
      %v266 = vmul.f32 %v265, 1.442695
      %v267 = vpow.pop %v266
      %v268 = vsel %vm204, %v267, 0.0
      %269 = vadd.xlane.f32.xlu0 %v268
      %v270 = vpop.xlane.xlu0 %269
      %v271 = vrcp.pop %v270
      %v272 = vmul.f32 %v267, %v271
      %v273 = vpack.c.bf16 %v272, %v272
      %274 = vrot.lane.b32.xlu0 %v181, 48
      %v275 = vpop.permute.xlu0 %274
      %v277 = vsel %vm204, %v273, 0
      %v280 = vsel %vm222, %v275, 0
      %282 = vmatpush.bf16.msra.mxu0 0
      %283 = vmatpush.bf16.msra.mxu0 0
      %284 = vmatpush.bf16.msra.mxu0 0
      %285 = vmatpush.bf16.msra.mxu0 0
      %286 = vmatpush.bf16.msra.mxu0 0
      %287 = vmatpush.bf16.msra.mxu0 0
      %288 = vmatpush.bf16.msra.mxu0 0
      %289 = vmatpush.bf16.msra.mxu0 %v280
      %290 = vmatmul.bf16.gmra.mxu0 %v277
      %v291 = vpop.f32.mrf.mxu0
      %v292 = vadd.f32 0.0, %v291
      %v293 = vpop.f32.mrf.mxu0
      %294 = vdwg.mxu0
      %296 = vrot.lane.b32.xlu0 %v292, 16
      %v297 = vpop.permute.xlu0 %296
      %v299 = vsel %vm184, %v236, %v297
      %v300 = vpack.c.bf16 %v299, %v299
      %vm301 = vcmask 257024
      %302 = vst.msk [vmem:[%s172] sm:$0xf] %vm301, %v300
      %p303 = scmp.lt.s32.totalorder %s17, 1
      %s304 = scalar_select %p303, %s17, 1
      %p305 = scmp.lt.s32.totalorder %s18, 0
      %s306 = scalar_select %p305, %s18, 0
      %s307 = sadd.s32 %s306, %s304
      %s308 = smul.addr %s307, 4
      %s309 = scalar_lea.vmem %s2, %s308
      // Predicated region
      $region29: #{fwd.14} parent=27 // pred_check
        %p310 = pneg %p97
      $region30: #{fwd.14} parent=27 // pred_check_branch
        %312 = sbr.rel (%p310) target = $region32
      $region31: #{fwd.14} parent=27 // pred_region
        _
      $region32: #{fwd.14} parent=27 // pred_fallthru
        _
    $region28: #{fwd.14} parent=5 // pred_fallthru
      _
    %p313 = scmp.le.s32.totalorder 2, %s8
    // Predicated region
    $region33: #{fwd.14} parent=5 // pred_check
      %p314 = pneg %p313
    $region34: #{fwd.14} parent=5 // pred_check_branch
      %316 = sbr.rel (%p314) target = $region36
    $region35: #{fwd.14} parent=5 // pred_region
      %s317 = ssub.s32 %s8, 2
      // Predicated region
      $region37: #{fwd.14} parent=35 // pred_check
        %p318 = pneg %p103
      $region38: #{fwd.14} parent=35 // pred_check_branch
        %320 = sbr.rel (%p318) target = $region40
      $region39: #{fwd.14} parent=35 // pred_region
        %p321 = scmp.lt.s32.totalorder %s19, 1
        %s322 = scalar_select %p321, %s19, 1
        %p323 = scmp.lt.s32.totalorder %s20, 0
        %s324 = scalar_select %p323, %s20, 0
        %s325 = sadd.s32 %s324, %s322
        %s326 = smul.addr %s325, 4
        %s327 = scalar_lea.vmem %s2, %s326
      $region40: #{fwd.14} parent=35 // pred_fallthru
        _
    $region36: #{fwd.14} parent=5 // pred_fallthru
      _
  $region6: #{fwd.14} parent=0 // loop_footer
    %s12 = sadd.s32 1, %s8
  $region7: #{fwd.14} parent=0 // loop_footer_branch
    %7 = sbr.rel target = $region3
  $region8: #{fwd.14} parent=0 // loop_exit
    _

// kernel: fwd.15
$region0: #{fwd.15}
  #allocation0 [shape = 'u32[]', space=smem, size = 0x4, offset = 0x4, fixed_abs, tag = 'smem constant byte address 0x4 - core index']
  #allocation1 [shape = 'u32[72,128]{1,0:T(1,128)}', space=vmem, size = 0x9000, scoped, tag = 'internal scratch']
  #allocation2 [shape = 'f32[16,32]{1,0:T(8,128)}', space=vmem, size = 0x2000, scoped, tag = 'scratch operand']
  %s0 = inlined_call_operand.vmem [shape: bf16[16,32], index: 0, kind: input, shape index: {}]
  %s1 = inlined_call_operand.vmem [shape: bf16[32,32], index: 1, kind: input, shape index: {}]
  %s2 = inlined_call_operand.vmem [shape: f32[1,32], index: 2, kind: input, shape index: {}]
  %s3 = inlined_call_operand.vmem [shape: bf16[16,32], index: 3, kind: input, shape index: {}]
  %s4 = inlined_call_operand.vmem [shape: f32[1,32], index: 4, kind: input, shape index: {}]
  %s5 = inlined_call_operand.vmem [shape: f32[1,32], index: 5, kind: input, shape index: {}]
  %s6 = inlined_call_operand.vmem [shape: bf16[16,32], index: 6, kind: output, shape index: {}]
  %s7 = sld [smem:[#allocation0]]
  $region42: #{fwd.15} parent=0
    _
  %s9 = ssub.s32 1, %s7
  %s10 = scalar_select 0, %s9, %s7
  // Predicated region
  $region2: #{fwd.15} parent=0 // pred_check
    _
  $region3: #{fwd.15} parent=0 // pred_check_branch
    %12 = sbr.rel (0) target = $region5
  $region4: #{fwd.15} parent=0 // pred_region
    _
  $region5: #{fwd.15} parent=0 // pred_fallthru
    _
  // Predicated region
  $region6: #{fwd.15} parent=0 // pred_check
    _
  $region7: #{fwd.15} parent=0 // pred_check_branch
    %14 = sbr.rel (0) target = $region9
  $region8: #{fwd.15} parent=0 // pred_region
    _
  $region9: #{fwd.15} parent=0 // pred_fallthru
    _
  // Predicated region
  $region10: #{fwd.15} parent=0 // pred_check
    _
  $region11: #{fwd.15} parent=0 // pred_check_branch
    %16 = sbr.rel (0) target = $region13
  $region12: #{fwd.15} parent=0 // pred_region
    _
  $region13: #{fwd.15} parent=0 // pred_fallthru
    _
  // Predicated region
  $region14: #{fwd.15} parent=0 // pred_check
    _
  $region15: #{fwd.15} parent=0 // pred_check_branch
    %18 = sbr.rel (0) target = $region17
  $region16: #{fwd.15} parent=0 // pred_region
    _
  $region17: #{fwd.15} parent=0 // pred_fallthru
    _
  // Predicated region
  $region18: #{fwd.15} parent=0 // pred_check
    _
  $region19: #{fwd.15} parent=0 // pred_check_branch
    %20 = sbr.rel (0) target = $region21
  $region20: #{fwd.15} parent=0 // pred_region
    _
  $region21: #{fwd.15} parent=0 // pred_fallthru
    _
  // Predicated region
  $region22: #{fwd.15} parent=0 // pred_check
    _
  $region23: #{fwd.15} parent=0 // pred_check_branch
    %22 = sbr.rel (0) target = $region25
  $region24: #{fwd.15} parent=0 // pred_region
    _
  $region25: #{fwd.15} parent=0 // pred_fallthru
    _
  %p24 = scmp.eq.s32.totalorder 0, 0
  // Predicated region
  $region26: #{fwd.15} parent=0 // pred_check
    %p25 = pneg %p24
  $region27: #{fwd.15} parent=0 // pred_check_branch
    %27 = sbr.rel (%p25) target = $region29
  $region28: #{fwd.15} parent=0 // pred_region
    %vm28 = vcmask 261120
    %29 = vst.msk [vmem:[#allocation2] sm:$0xff] %vm28, 0.0
    %30 = vst.msk [vmem:[#allocation2 + $0x8] sm:$0xff] %vm28, 0.0
  $region29: #{fwd.15} parent=0 // pred_fallthru
    _
  %v31 = vld [vmem:[#allocation2] sm:$0xff]
  %v32 = vld [vmem:[#allocation2 + $0x8] sm:$0xff]
  %v33 = vld [vmem:[%s0] sm:$0xf]
  %v34 = vld [vmem:[%s0 + $0x4] sm:$0xf]
  %v35 = vld [vmem:[%s1] sm:$0xf]
  %v36 = vld [vmem:[%s1 + $0x4] sm:$0xf]
  %v37 = vld [vmem:[%s1 + $0x8] sm:$0xf]
  %v38 = vld [vmem:[%s1 + $0xc] sm:$0xf]
  %v41 = vunpack.c.l.b16 %v33
  %v42 = vunpack.c.l.b16 %v34
  %v43 = vpack.c.b16 %v42, %v41
  %v48 = vunpack.c.l.b16 %v35
  %v49 = vunpack.c.l.b16 %v36
  %v50 = vunpack.c.l.b16 %v37
  %v51 = vunpack.c.l.b16 %v38
  %v52 = vpack.c.b16 %v49, %v48
  %v53 = vpack.c.b16 %v51, %v50
  %vm56 = vcmask 261120
  %v58 = vsel %vm56, %v43, 0
  %60 = vmatpush.bf16.msra.mxu0 0
  %61 = vmatpush.bf16.msra.mxu0 0
  %62 = vmatpush.bf16.msra.mxu0 0
  %63 = vmatpush.bf16.msra.mxu0 0
  %64 = vmatpush.bf16.msra.mxu0 0
  %65 = vmatpush.bf16.msra.mxu0 0
  %66 = vmatpush.bf16.msra.mxu0 %v53
  %67 = vmatpush.bf16.msra.mxu0 %v52
  %68 = vmatmul.bf16.gmra.mxu0 %v58
  %v69 = vpop.f32.mrf.mxu0
  %v70 = vadd.f32 0.0, %v69
  %v71 = vpop.f32.mrf.mxu0
  %v72 = vadd.f32 0.0, %v71
  %73 = vdwg.mxu0
  %v74 = vadd.f32 %v31, %v70
  %v75 = vadd.f32 %v32, %v72
  %76 = vst.msk [vmem:[#allocation2] sm:$0xff] %vm56, %v74
  %77 = vst.msk [vmem:[#allocation2 + $0x8] sm:$0xff] %vm56, %v75
  // Predicated region
  $region30: #{fwd.15} parent=0 // pred_check
    %p78 = pneg %p24
  $region31: #{fwd.15} parent=0 // pred_check_branch
    %80 = sbr.rel (%p78) target = $region33
  $region32: #{fwd.15} parent=0 // pred_region
    %v81 = vld [vmem:[#allocation2] sm:$0xff]
    %v82 = vld [vmem:[#allocation2 + $0x8] sm:$0xff]
    %v83 = vld [vmem:[%s2] sm:$0x1]
    %v85 = vperm.slane %v83, 0
    %v87 = vadd.f32 %v81, %v85
    %v88 = vadd.f32 %v82, %v85
    %v89 = vld [vmem:[%s3] sm:$0xf]
    %v90 = vld [vmem:[%s3 + $0x4] sm:$0xf]
    %v91 = vunpack.c.l.bf16 %v89
    %v92 = vunpack.c.l.bf16 %v90
    %v93 = vadd.f32 %v87, %v91
    %v94 = vadd.f32 %v88, %v92
    %v95 = vsel %vm56, %v93, 0.0
    %96 = vadd.xlane.f32.xlu0 %v95
    %v97 = vpop.xlane.xlu0 %96
    %v98 = vsel %vm56, %v94, 0.0
    %99 = vadd.xlane.f32.xlu0 %v98
    %v100 = vpop.xlane.xlu0 %99
    %v101 = vrcp.pop 32.0
    %v102 = vmul.f32 32.0, %v101
    %v103 = vsub.f32 1.0, %v102
    %v104 = vmul.f32 %v101, %v103
    %v105 = vadd.f32 %v101, %v104
    %vm106 = vweird.f32 %v101
    %v107 = vsel %vm106, %v101, %v105
    %v108 = vmul.f32 %v97, %v107
    %v109 = vmul.f32 %v100, %v107
    %v110 = vsub.f32 %v93, %v108
    %v111 = vsub.f32 %v94, %v109
    %v112 = vmul.f32 %v110, %v110
    %v113 = vmul.f32 %v111, %v111
    %v114 = vsel %vm56, %v112, 0.0
    %115 = vadd.xlane.f32.xlu0 %v114
    %v116 = vpop.xlane.xlu0 %115
    %v117 = vsel %vm56, %v113, 0.0
    %118 = vadd.xlane.f32.xlu0 %v117
    %v119 = vpop.xlane.xlu0 %118
    %v120 = vmul.f32 %v116, %v107
    %v121 = vmul.f32 %v119, %v107
    %v122 = vadd.f32 %v120, 1e-12
    %v123 = vadd.f32 %v121, 1e-12
    %v124 = vrsqrt.pop %v122
    %v125 = vmul.f32 %v124, %v122
    %v126 = vmul.f32 %v125, %v124
    %v127 = vmul.f32 0.5, %v126
    %v128 = vsub.f32 1.5, %v127
    %v129 = vmul.f32 %v124, %v128
    %vm130 = vweird.f32 %v122
    %vm131 = vweird.f32 %v124
    %vm132 = vmor %vm130, %vm131
    %v133 = vsel %vm132, %v124, %v129
    %v134 = vrsqrt.pop %v123
    %v135 = vmul.f32 %v134, %v123
    %v136 = vmul.f32 %v135, %v134
    %v137 = vmul.f32 0.5, %v136
    %v138 = vsub.f32 1.5, %v137
    %v139 = vmul.f32 %v134, %v138
    %vm140 = vweird.f32 %v123
    %vm141 = vweird.f32 %v134
    %vm142 = vmor %vm140, %vm141
    %v143 = vsel %vm142, %v134, %v139
    %v144 = vmul.f32 %v110, %v133
    %v145 = vmul.f32 %v111, %v143
    %v146 = vld [vmem:[%s4] sm:$0x1]
    %v148 = vperm.slane %v146, 0
    %v150 = vmul.f32 %v144, %v148
    %v151 = vmul.f32 %v145, %v148
    %v152 = vld [vmem:[%s5] sm:$0x1]
    %v154 = vperm.slane %v152, 0
    %v156 = vadd.f32 %v150, %v154
    %v157 = vadd.f32 %v151, %v154
    %v158 = vpack.c.bf16 %v156, %v156
    %v159 = vpack.c.bf16 %v157, %v157
    %vm160 = vcmask 257024
    %161 = vst.msk [vmem:[%s6] sm:$0xf] %vm160, %v158
    %162 = vst.msk [vmem:[%s6 + $0x4] sm:$0xf] %vm160, %v159
  $region33: #{fwd.15} parent=0 // pred_fallthru
    _
  // Predicated region
  $region34: #{fwd.15} parent=0 // pred_check
    _
  $region35: #{fwd.15} parent=0 // pred_check_branch
    %164 = sbr.rel (0) target = $region37
  $region36: #{fwd.15} parent=0 // pred_region
    _
  $region37: #{fwd.15} parent=0 // pred_fallthru
    _
  // Predicated region
  $region38: #{fwd.15} parent=0 // pred_check
    _
  $region39: #{fwd.15} parent=0 // pred_check_branch
    %166 = sbr.rel (0) target = $region41
  $region40: #{fwd.15} parent=0 // pred_region
    _
  $region41: #{fwd.15} parent=0 // pred_fallthru
    _

// kernel: fwd.12
$region0: #{fwd.12}
  #allocation0 [shape = 'u32[]', space=smem, size = 0x4, offset = 0x4, fixed_abs, tag = 'smem constant byte address 0x4 - core index']
  #allocation1 [shape = 'u32[72,128]{1,0:T(1,128)}', space=vmem, size = 0x9000, scoped, tag = 'internal scratch']
  %s0 = inlined_call_operand.vmem [shape: f32[16,32], index: 0, kind: input, shape index: {}]
  %s1 = inlined_call_operand.vmem [shape: f32[1,32], index: 1, kind: input, shape index: {}]
  %s2 = inlined_call_operand.vmem [shape: f32[1,32], index: 2, kind: input, shape index: {}]
  %s3 = inlined_call_operand.vmem [shape: bf16[16,32], index: 3, kind: output, shape index: {}]
  %s4 = sld [smem:[#allocation0]]
  $region22: #{fwd.12} parent=0
    _
  %s6 = ssub.s32 1, %s4
  %s7 = scalar_select 0, %s6, %s4
  // Predicated region
  $region2: #{fwd.12} parent=0 // pred_check
    _
  $region3: #{fwd.12} parent=0 // pred_check_branch
    %9 = sbr.rel (0) target = $region5
  $region4: #{fwd.12} parent=0 // pred_region
    _
  $region5: #{fwd.12} parent=0 // pred_fallthru
    _
  // Predicated region
  $region6: #{fwd.12} parent=0 // pred_check
    _
  $region7: #{fwd.12} parent=0 // pred_check_branch
    %11 = sbr.rel (0) target = $region9
  $region8: #{fwd.12} parent=0 // pred_region
    _
  $region9: #{fwd.12} parent=0 // pred_fallthru
    _
  // Predicated region
  $region10: #{fwd.12} parent=0 // pred_check
    _
  $region11: #{fwd.12} parent=0 // pred_check_branch
    %13 = sbr.rel (0) target = $region13
  $region12: #{fwd.12} parent=0 // pred_region
    _
  $region13: #{fwd.12} parent=0 // pred_fallthru
    _
  %v14 = vld [vmem:[%s0] sm:$0xff]
  %v15 = vld [vmem:[%s0 + $0x8] sm:$0xff]
  %vm16 = vcmask 261120
  %v17 = vsel %vm16, %v14, 0.0
  %18 = vadd.xlane.f32.xlu0 %v17
  %v19 = vpop.xlane.xlu0 %18
  %v20 = vsel %vm16, %v15, 0.0
  %21 = vadd.xlane.f32.xlu0 %v20
  %v22 = vpop.xlane.xlu0 %21
  %v23 = vrcp.pop 32.0
  %v24 = vmul.f32 32.0, %v23
  %v25 = vsub.f32 1.0, %v24
  %v26 = vmul.f32 %v23, %v25
  %v27 = vadd.f32 %v23, %v26
  %vm28 = vweird.f32 %v23
  %v29 = vsel %vm28, %v23, %v27
  %v30 = vmul.f32 %v19, %v29
  %v31 = vmul.f32 %v22, %v29
  %v32 = vsub.f32 %v14, %v30
  %v33 = vsub.f32 %v15, %v31
  %v34 = vmul.f32 %v32, %v32
  %v35 = vmul.f32 %v33, %v33
  %v36 = vsel %vm16, %v34, 0.0
  %37 = vadd.xlane.f32.xlu0 %v36
  %v38 = vpop.xlane.xlu0 %37
  %v39 = vsel %vm16, %v35, 0.0
  %40 = vadd.xlane.f32.xlu0 %v39
  %v41 = vpop.xlane.xlu0 %40
  %v42 = vmul.f32 %v38, %v29
  %v43 = vmul.f32 %v41, %v29
  %v44 = vadd.f32 %v42, 1e-12
  %v45 = vadd.f32 %v43, 1e-12
  %v46 = vrsqrt.pop %v44
  %v47 = vmul.f32 %v46, %v44
  %v48 = vmul.f32 %v47, %v46
  %v49 = vmul.f32 0.5, %v48
  %v50 = vsub.f32 1.5, %v49
  %v51 = vmul.f32 %v46, %v50
  %vm52 = vweird.f32 %v44
  %vm53 = vweird.f32 %v46
  %vm54 = vmor %vm52, %vm53
  %v55 = vsel %vm54, %v46, %v51
  %v56 = vrsqrt.pop %v45
  %v57 = vmul.f32 %v56, %v45
  %v58 = vmul.f32 %v57, %v56
  %v59 = vmul.f32 0.5, %v58
  %v60 = vsub.f32 1.5, %v59
  %v61 = vmul.f32 %v56, %v60
  %vm62 = vweird.f32 %v45
  %vm63 = vweird.f32 %v56
  %vm64 = vmor %vm62, %vm63
  %v65 = vsel %vm64, %v56, %v61
  %v66 = vmul.f32 %v32, %v55
  %v67 = vmul.f32 %v33, %v65
  %v68 = vld [vmem:[%s1] sm:$0x1]
  %v70 = vperm.slane %v68, 0
  %v72 = vmul.f32 %v66, %v70
  %v73 = vmul.f32 %v67, %v70
  %v74 = vld [vmem:[%s2] sm:$0x1]
  %v76 = vperm.slane %v74, 0
  %v78 = vadd.f32 %v72, %v76
  %v79 = vadd.f32 %v73, %v76
  %v80 = vpack.c.bf16 %v78, %v78
  %v81 = vpack.c.bf16 %v79, %v79
  %vm82 = vcmask 257024
  %83 = vst.msk [vmem:[%s3] sm:$0xf] %vm82, %v80
  %84 = vst.msk [vmem:[%s3 + $0x4] sm:$0xf] %vm82, %v81
  // Predicated region
  $region14: #{fwd.12} parent=0 // pred_check
    _
  $region15: #{fwd.12} parent=0 // pred_check_branch
    %86 = sbr.rel (0) target = $region17
  $region16: #{fwd.12} parent=0 // pred_region
    _
  $region17: #{fwd.12} parent=0 // pred_fallthru
    _
  // Predicated region
  $region18: #{fwd.12} parent=0 // pred_check
    _
  $region19: #{fwd.12} parent=0 // pred_check_branch
    %88 = sbr.rel (0) target = $region21
  $region20: #{fwd.12} parent=0 // pred_region
    _
  $region21: #{fwd.12} parent=0 // pred_fallthru
    _

// kernel: fwd.16
$region0: #{fwd.16}
  #allocation0 [shape = 'u32[]', space=smem, size = 0x4, offset = 0x4, fixed_abs, tag = 'smem constant byte address 0x4 - core index']
  #allocation1 [shape = 'u32[72,128]{1,0:T(1,128)}', space=vmem, size = 0x9000, scoped, tag = 'internal scratch']
  #allocation2 [shape = 'f32[16,64]{1,0:T(8,128)}', space=vmem, size = 0x2000, scoped, tag = 'scratch operand']
  %s0 = inlined_call_operand.vmem [shape: bf16[16,32], index: 0, kind: input, shape index: {}]
  %s1 = inlined_call_operand.vmem [shape: bf16[32,64], index: 1, kind: input, shape index: {}]
  %s2 = inlined_call_operand.vmem [shape: f32[1,64], index: 2, kind: input, shape index: {}]
  %s3 = inlined_call_operand.vmem [shape: bf16[16,64], index: 3, kind: output, shape index: {}]
  %s4 = sld [smem:[#allocation0]]
  $region30: #{fwd.16} parent=0
    _
  %s6 = ssub.s32 1, %s4
  %s7 = scalar_select 0, %s6, %s4
  // Predicated region
  $region2: #{fwd.16} parent=0 // pred_check
    _
  $region3: #{fwd.16} parent=0 // pred_check_branch
    %9 = sbr.rel (0) target = $region5
  $region4: #{fwd.16} parent=0 // pred_region
    _
  $region5: #{fwd.16} parent=0 // pred_fallthru
    _
  // Predicated region
  $region6: #{fwd.16} parent=0 // pred_check
    _
  $region7: #{fwd.16} parent=0 // pred_check_branch
    %11 = sbr.rel (0) target = $region9
  $region8: #{fwd.16} parent=0 // pred_region
    _
  $region9: #{fwd.16} parent=0 // pred_fallthru
    _
  // Predicated region
  $region10: #{fwd.16} parent=0 // pred_check
    _
  $region11: #{fwd.16} parent=0 // pred_check_branch
    %13 = sbr.rel (0) target = $region13
  $region12: #{fwd.16} parent=0 // pred_region
    _
  $region13: #{fwd.16} parent=0 // pred_fallthru
    _
  %p15 = scmp.eq.s32.totalorder 0, 0
  // Predicated region
  $region14: #{fwd.16} parent=0 // pred_check
    %p16 = pneg %p15
  $region15: #{fwd.16} parent=0 // pred_check_branch
    %18 = sbr.rel (%p16) target = $region17
  $region16: #{fwd.16} parent=0 // pred_region
    %vm19 = vcmask 523264
    %20 = vst.msk [vmem:[#allocation2] sm:$0xff] %vm19, 0.0
    %21 = vst.msk [vmem:[#allocation2 + $0x8] sm:$0xff] %vm19, 0.0
  $region17: #{fwd.16} parent=0 // pred_fallthru
    _
  %v22 = vld [vmem:[#allocation2] sm:$0xff]
  %v23 = vld [vmem:[#allocation2 + $0x8] sm:$0xff]
  %v24 = vld [vmem:[%s0] sm:$0xf]
  %v25 = vld [vmem:[%s0 + $0x4] sm:$0xf]
  %v26 = vld [vmem:[%s1] sm:$0xf]
  %v27 = vld [vmem:[%s1 + $0x4] sm:$0xf]
  %v28 = vld [vmem:[%s1 + $0x8] sm:$0xf]
  %v29 = vld [vmem:[%s1 + $0xc] sm:$0xf]
  %v32 = vunpack.c.l.b16 %v24
  %v33 = vunpack.c.l.b16 %v25
  %v34 = vpack.c.b16 %v33, %v32
  %v39 = vunpack.c.l.b16 %v26
  %v40 = vunpack.c.l.b16 %v27
  %v41 = vunpack.c.l.b16 %v28
  %v42 = vunpack.c.l.b16 %v29
  %v43 = vpack.c.b16 %v40, %v39
  %v44 = vpack.c.b16 %v42, %v41
  %vm47 = vcmask 261120
  %v49 = vsel %vm47, %v34, 0
  %51 = vmatpush.bf16.msra.mxu0 0
  %52 = vmatpush.bf16.msra.mxu0 0
  %53 = vmatpush.bf16.msra.mxu0 0
  %54 = vmatpush.bf16.msra.mxu0 0
  %55 = vmatpush.bf16.msra.mxu0 0
  %56 = vmatpush.bf16.msra.mxu0 0
  %57 = vmatpush.bf16.msra.mxu0 %v44
  %58 = vmatpush.bf16.msra.mxu0 %v43
  %59 = vmatmul.bf16.gmra.mxu0 %v49
  %v60 = vpop.f32.mrf.mxu0
  %v61 = vadd.f32 0.0, %v60
  %v62 = vpop.f32.mrf.mxu0
  %v63 = vadd.f32 0.0, %v62
  %64 = vdwg.mxu0
  %v65 = vadd.f32 %v22, %v61
  %v66 = vadd.f32 %v23, %v63
  %vm67 = vcmask 523264
  %68 = vst.msk [vmem:[#allocation2] sm:$0xff] %vm67, %v65
  %69 = vst.msk [vmem:[#allocation2 + $0x8] sm:$0xff] %vm67, %v66
  // Predicated region
  $region18: #{fwd.16} parent=0 // pred_check
    %p70 = pneg %p15
  $region19: #{fwd.16} parent=0 // pred_check_branch
    %72 = sbr.rel (%p70) target = $region21
  $region20: #{fwd.16} parent=0 // pred_region
    %v73 = vld [vmem:[#allocation2] sm:$0xff]
    %v74 = vld [vmem:[#allocation2 + $0x8] sm:$0xff]
    %v75 = vld [vmem:[%s2] sm:$0x1]
    %v77 = vperm.slane %v75, 0
    %v79 = vadd.f32 %v73, %v77
    %v80 = vadd.f32 %v74, %v77
    %v81 = vmul.f32 %v79, 0.5
    %v82 = vmul.f32 %v80, 0.5
    %v83 = vmul.f32 %v79, 0.044715
    %v84 = vmul.f32 %v80, 0.044715
    %v85 = vmul.f32 %v83, %v79
    %v86 = vmul.f32 %v84, %v80
    %v87 = vmul.f32 %v85, %v79
    %v88 = vmul.f32 %v86, %v80
    %v89 = vadd.f32 %v79, %v87
    %v90 = vadd.f32 %v80, %v88
    %v91 = vmul.f32 %v89, 0.7978846
    %v92 = vmul.f32 %v90, 0.7978846
    %v93 = vtanh.pop %v91
    %v94 = vtanh.pop %v92
    %v95 = vadd.f32 %v93, 1.0
    %v96 = vadd.f32 %v94, 1.0
    %v97 = vmul.f32 %v81, %v95
    %v98 = vmul.f32 %v82, %v96
    %v99 = vpack.c.bf16 %v97, %v97
    %v100 = vpack.c.bf16 %v98, %v98
    %vm101 = vcmask 519168
    %102 = vst.msk [vmem:[%s3] sm:$0xf] %vm101, %v99
    %103 = vst.msk [vmem:[%s3 + $0x4] sm:$0xf] %vm101, %v100
  $region21: #{fwd.16} parent=0 // pred_fallthru
    _
  // Predicated region
  $region22: #{fwd.16} parent=0 // pred_check
    _
  $region23: #{fwd.16} parent=0 // pred_check_branch
    %105 = sbr.rel (0) target = $region25
  $region24: #{fwd.16} parent=0 // pred_region
    _
  $region25: #{fwd.16} parent=0 // pred_fallthru
    _
  // Predicated region
  $region26: #{fwd.16} parent=0 // pred_check
    _
  $region27: #{fwd.16} parent=0 // pred_check_branch
    %107 = sbr.rel (0) target = $region29
  $region28: #{fwd.16} parent=0 // pred_region
    _
  $region29: #{fwd.16} parent=0 // pred_fallthru
    _

// kernel: fwd.23
$region0: #{fwd.23}
  #allocation0 [shape = 'u32[]', space=smem, size = 0x4, offset = 0x4, fixed_abs, tag = 'smem constant byte address 0x4 - core index']
  #allocation1 [shape = 'u32[72,128]{1,0:T(1,128)}', space=vmem, size = 0x9000, scoped, tag = 'internal scratch']
  %s0 = inlined_call_operand.vmem [shape: bf16[8,32], index: 0, kind: input, shape index: {}]
  %s1 = inlined_call_operand.vmem [shape: bf16[32,32], index: 1, kind: input, shape index: {}]
  %s2 = inlined_call_operand.vmem [shape: f32[1,32], index: 2, kind: input, shape index: {}]
  %s3 = inlined_call_operand.vmem [shape: bf16[32,128], index: 3, kind: input, shape index: {}]
  %s4 = inlined_call_operand.vmem [shape: f32[1,128], index: 4, kind: input, shape index: {}]
  %s5 = inlined_call_operand.vmem [shape: f32[8,128], index: 5, kind: output, shape index: {}]
  %s6 = sld [smem:[#allocation0]]
  $region30: #{fwd.23} parent=0
    _
  %s8 = ssub.s32 1, %s6
  %s9 = scalar_select 0, %s8, %s6
  // Predicated region
  $region2: #{fwd.23} parent=0 // pred_check
    _
  $region3: #{fwd.23} parent=0 // pred_check_branch
    %11 = sbr.rel (0) target = $region5
  $region4: #{fwd.23} parent=0 // pred_region
    _
  $region5: #{fwd.23} parent=0 // pred_fallthru
    _
  // Predicated region
  $region6: #{fwd.23} parent=0 // pred_check
    _
  $region7: #{fwd.23} parent=0 // pred_check_branch
    %13 = sbr.rel (0) target = $region9
  $region8: #{fwd.23} parent=0 // pred_region
    _
  $region9: #{fwd.23} parent=0 // pred_fallthru
    _
  // Predicated region
  $region10: #{fwd.23} parent=0 // pred_check
    _
  $region11: #{fwd.23} parent=0 // pred_check_branch
    %15 = sbr.rel (0) target = $region13
  $region12: #{fwd.23} parent=0 // pred_region
    _
  $region13: #{fwd.23} parent=0 // pred_fallthru
    _
  // Predicated region
  $region14: #{fwd.23} parent=0 // pred_check
    _
  $region15: #{fwd.23} parent=0 // pred_check_branch
    %17 = sbr.rel (0) target = $region17
  $region16: #{fwd.23} parent=0 // pred_region
    _
  $region17: #{fwd.23} parent=0 // pred_fallthru
    _
  // Predicated region
  $region18: #{fwd.23} parent=0 // pred_check
    _
  $region19: #{fwd.23} parent=0 // pred_check_branch
    %19 = sbr.rel (0) target = $region21
  $region20: #{fwd.23} parent=0 // pred_region
    _
  $region21: #{fwd.23} parent=0 // pred_fallthru
    _
  %v21 = vld [vmem:[%s0] sm:$0xf]
  %v22 = vld [vmem:[%s1] sm:$0xf]
  %v23 = vld [vmem:[%s1 + $0x4] sm:$0xf]
  %v24 = vld [vmem:[%s1 + $0x8] sm:$0xf]
  %v25 = vld [vmem:[%s1 + $0xc] sm:$0xf]
  %v26 = vld [vmem:[%s2] sm:$0x1]
  %v28 = vperm.slane %v26, 0
  %v34 = vunpack.c.l.b16 %v22
  %v35 = vunpack.c.l.b16 %v23
  %v36 = vunpack.c.l.b16 %v24
  %v37 = vunpack.c.l.b16 %v25
  %v38 = vpack.c.b16 %v35, %v34
  %v39 = vpack.c.b16 %v37, %v36
  %vm42 = vcmask 261120
  %v44 = vsel %vm42, %v21, 0
  %46 = vmatpush.bf16.msra.mxu0 0
  %47 = vmatpush.bf16.msra.mxu0 0
  %48 = vmatpush.bf16.msra.mxu0 0
  %49 = vmatpush.bf16.msra.mxu0 0
  %50 = vmatpush.bf16.msra.mxu0 0
  %51 = vmatpush.bf16.msra.mxu0 0
  %52 = vmatpush.bf16.msra.mxu0 %v39
  %53 = vmatpush.bf16.msra.mxu0 %v38
  %54 = vmatmul.bf16.gmra.mxu0 %v44
  %v55 = vpop.f32.mrf.mxu0
  %v56 = vadd.f32 %v28, %v55
  %v57 = vpop.f32.mrf.mxu0
  %58 = vdwg.mxu0
  %v59 = vtanh.pop %v56
  %v60 = vpack.c.bf16 %v59, %v59
  %v61 = vld [vmem:[%s3] sm:$0xf]
  %v62 = vld [vmem:[%s3 + $0x4] sm:$0xf]
  %v63 = vld [vmem:[%s3 + $0x8] sm:$0xf]
  %v64 = vld [vmem:[%s3 + $0xc] sm:$0xf]
  %v65 = vld [vmem:[%s4] sm:$0x1]
  %v67 = vperm.slane %v65, 0
  %v73 = vunpack.c.l.b16 %v61
  %v74 = vunpack.c.l.b16 %v62
  %v75 = vunpack.c.l.b16 %v63
  %v76 = vunpack.c.l.b16 %v64
  %v77 = vpack.c.b16 %v74, %v73
  %v78 = vpack.c.b16 %v76, %v75
  %v82 = vsel %vm42, %v60, 0
  %84 = vmatpush.bf16.msra.mxu0 0
  %85 = vmatpush.bf16.msra.mxu0 0
  %86 = vmatpush.bf16.msra.mxu0 0
  %87 = vmatpush.bf16.msra.mxu0 0
  %88 = vmatpush.bf16.msra.mxu0 0
  %89 = vmatpush.bf16.msra.mxu0 0
  %90 = vmatpush.bf16.msra.mxu0 %v78
  %91 = vmatpush.bf16.msra.mxu0 %v77
  %92 = vmatmul.bf16.gmra.mxu0 %v82
  %v93 = vpop.f32.mrf.mxu0
  %v94 = vadd.f32 %v67, %v93
  %v95 = vpop.f32.mrf.mxu0
  %96 = vdwg.mxu0
  %97 = vst [vmem:[%s5] sm:$0xff] %v94
  // Predicated region
  $region22: #{fwd.23} parent=0 // pred_check
    _
  $region23: #{fwd.23} parent=0 // pred_check_branch
    %99 = sbr.rel (0) target = $region25
  $region24: #{fwd.23} parent=0 // pred_region
    _
  $region25: #{fwd.23} parent=0 // pred_fallthru
    _
  // Predicated region
  $region26: #{fwd.23} parent=0 // pred_check
    _
  $region27: #{fwd.23} parent=0 // pred_check_branch
    %101 = sbr.rel (0) target = $region29
  $region28: #{fwd.23} parent=0 // pred_region
    _
  $region29: #{fwd.23} parent=0 // pred_fallthru
    _

// kernel: fwd.17
$region0: #{fwd.17}
  #allocation0 [shape = 'u32[]', space=smem, size = 0x4, offset = 0x4, fixed_abs, tag = 'smem constant byte address 0x4 - core index']
  #allocation1 [shape = 'u32[72,128]{1,0:T(1,128)}', space=vmem, size = 0x9000, scoped, tag = 'internal scratch']
  #allocation2 [shape = 'f32[16,32]{1,0:T(8,128)}', space=vmem, size = 0x2000, scoped, tag = 'scratch operand']
  %s0 = inlined_call_operand.vmem [shape: bf16[16,64], index: 0, kind: input, shape index: {}]
  %s1 = inlined_call_operand.vmem [shape: bf16[64,32], index: 1, kind: input, shape index: {}]
  %s2 = inlined_call_operand.vmem [shape: f32[1,32], index: 2, kind: input, shape index: {}]
  %s3 = inlined_call_operand.vmem [shape: bf16[16,32], index: 3, kind: input, shape index: {}]
  %s4 = inlined_call_operand.vmem [shape: f32[1,32], index: 4, kind: input, shape index: {}]
  %s5 = inlined_call_operand.vmem [shape: f32[1,32], index: 5, kind: input, shape index: {}]
  %s6 = inlined_call_operand.vmem [shape: bf16[16,32], index: 6, kind: output, shape index: {}]
  %s7 = sld [smem:[#allocation0]]
  $region42: #{fwd.17} parent=0
    _
  %s9 = ssub.s32 1, %s7
  %s10 = scalar_select 0, %s9, %s7
  // Predicated region
  $region2: #{fwd.17} parent=0 // pred_check
    _
  $region3: #{fwd.17} parent=0 // pred_check_branch
    %12 = sbr.rel (0) target = $region5
  $region4: #{fwd.17} parent=0 // pred_region
    _
  $region5: #{fwd.17} parent=0 // pred_fallthru
    _
  // Predicated region
  $region6: #{fwd.17} parent=0 // pred_check
    _
  $region7: #{fwd.17} parent=0 // pred_check_branch
    %14 = sbr.rel (0) target = $region9
  $region8: #{fwd.17} parent=0 // pred_region
    _
  $region9: #{fwd.17} parent=0 // pred_fallthru
    _
  // Predicated region
  $region10: #{fwd.17} parent=0 // pred_check
    _
  $region11: #{fwd.17} parent=0 // pred_check_branch
    %16 = sbr.rel (0) target = $region13
  $region12: #{fwd.17} parent=0 // pred_region
    _
  $region13: #{fwd.17} parent=0 // pred_fallthru
    _
  // Predicated region
  $region14: #{fwd.17} parent=0 // pred_check
    _
  $region15: #{fwd.17} parent=0 // pred_check_branch
    %18 = sbr.rel (0) target = $region17
  $region16: #{fwd.17} parent=0 // pred_region
    _
  $region17: #{fwd.17} parent=0 // pred_fallthru
    _
  // Predicated region
  $region18: #{fwd.17} parent=0 // pred_check
    _
  $region19: #{fwd.17} parent=0 // pred_check_branch
    %20 = sbr.rel (0) target = $region21
  $region20: #{fwd.17} parent=0 // pred_region
    _
  $region21: #{fwd.17} parent=0 // pred_fallthru
    _
  // Predicated region
  $region22: #{fwd.17} parent=0 // pred_check
    _
  $region23: #{fwd.17} parent=0 // pred_check_branch
    %22 = sbr.rel (0) target = $region25
  $region24: #{fwd.17} parent=0 // pred_region
    _
  $region25: #{fwd.17} parent=0 // pred_fallthru
    _
  %p24 = scmp.eq.s32.totalorder 0, 0
  // Predicated region
  $region26: #{fwd.17} parent=0 // pred_check
    %p25 = pneg %p24
  $region27: #{fwd.17} parent=0 // pred_check_branch
    %27 = sbr.rel (%p25) target = $region29
  $region28: #{fwd.17} parent=0 // pred_region
    %vm28 = vcmask 261120
    %29 = vst.msk [vmem:[#allocation2] sm:$0xff] %vm28, 0.0
    %30 = vst.msk [vmem:[#allocation2 + $0x8] sm:$0xff] %vm28, 0.0
  $region29: #{fwd.17} parent=0 // pred_fallthru
    _
  %v31 = vld [vmem:[#allocation2] sm:$0xff]
  %v32 = vld [vmem:[#allocation2 + $0x8] sm:$0xff]
  %v33 = vld [vmem:[%s0] sm:$0xf]
  %v34 = vld [vmem:[%s0 + $0x4] sm:$0xf]
  %v35 = vld [vmem:[%s1] sm:$0xf]
  %v36 = vld [vmem:[%s1 + $0x4] sm:$0xf]
  %v37 = vld [vmem:[%s1 + $0x8] sm:$0xf]
  %v38 = vld [vmem:[%s1 + $0xc] sm:$0xf]
  %v39 = vld [vmem:[%s1 + $0x10] sm:$0xf]
  %v40 = vld [vmem:[%s1 + $0x14] sm:$0xf]
  %v41 = vld [vmem:[%s1 + $0x18] sm:$0xf]
  %v42 = vld [vmem:[%s1 + $0x1c] sm:$0xf]
  %v45 = vunpack.c.l.b16 %v33
  %v46 = vunpack.c.l.b16 %v34
  %v47 = vpack.c.b16 %v46, %v45
  %v56 = vunpack.c.l.b16 %v35
  %v57 = vunpack.c.l.b16 %v36
  %v58 = vunpack.c.l.b16 %v37
  %v59 = vunpack.c.l.b16 %v38
  %v60 = vunpack.c.l.b16 %v39
  %v61 = vunpack.c.l.b16 %v40
  %v62 = vunpack.c.l.b16 %v41
  %v63 = vunpack.c.l.b16 %v42
  %v64 = vpack.c.b16 %v57, %v56
  %v65 = vpack.c.b16 %v59, %v58
  %v66 = vpack.c.b16 %v61, %v60
  %v67 = vpack.c.b16 %v63, %v62
  %vm72 = vcmask 523264
  %v74 = vsel %vm72, %v47, 0
  %76 = vmatpush.bf16.msra.mxu0 0
  %77 = vmatpush.bf16.msra.mxu0 0
  %78 = vmatpush.bf16.msra.mxu0 0
  %79 = vmatpush.bf16.msra.mxu0 0
  %80 = vmatpush.bf16.msra.mxu0 %v67
  %81 = vmatpush.bf16.msra.mxu0 %v66
  %82 = vmatpush.bf16.msra.mxu0 %v65
  %83 = vmatpush.bf16.msra.mxu0 %v64
  %84 = vmatmul.bf16.gmra.mxu0 %v74
  %v85 = vpop.f32.mrf.mxu0
  %v86 = vadd.f32 0.0, %v85
  %v87 = vpop.f32.mrf.mxu0
  %v88 = vadd.f32 0.0, %v87
  %89 = vdwg.mxu0
  %v90 = vadd.f32 %v31, %v86
  %v91 = vadd.f32 %v32, %v88
  %vm92 = vcmask 261120
  %93 = vst.msk [vmem:[#allocation2] sm:$0xff] %vm92, %v90
  %94 = vst.msk [vmem:[#allocation2 + $0x8] sm:$0xff] %vm92, %v91
  // Predicated region
  $region30: #{fwd.17} parent=0 // pred_check
    %p95 = pneg %p24
  $region31: #{fwd.17} parent=0 // pred_check_branch
    %97 = sbr.rel (%p95) target = $region33
  $region32: #{fwd.17} parent=0 // pred_region
    %v98 = vld [vmem:[#allocation2] sm:$0xff]
    %v99 = vld [vmem:[#allocation2 + $0x8] sm:$0xff]
    %v100 = vld [vmem:[%s2] sm:$0x1]
    %v102 = vperm.slane %v100, 0
    %v104 = vadd.f32 %v98, %v102
    %v105 = vadd.f32 %v99, %v102
    %v106 = vld [vmem:[%s3] sm:$0xf]
    %v107 = vld [vmem:[%s3 + $0x4] sm:$0xf]
    %v108 = vunpack.c.l.bf16 %v106
    %v109 = vunpack.c.l.bf16 %v107
    %v110 = vadd.f32 %v104, %v108
    %v111 = vadd.f32 %v105, %v109
    %v112 = vsel %vm92, %v110, 0.0
    %113 = vadd.xlane.f32.xlu0 %v112
    %v114 = vpop.xlane.xlu0 %113
    %v115 = vsel %vm92, %v111, 0.0
    %116 = vadd.xlane.f32.xlu0 %v115
    %v117 = vpop.xlane.xlu0 %116
    %v118 = vrcp.pop 32.0
    %v119 = vmul.f32 32.0, %v118
    %v120 = vsub.f32 1.0, %v119
    %v121 = vmul.f32 %v118, %v120
    %v122 = vadd.f32 %v118, %v121
    %vm123 = vweird.f32 %v118
    %v124 = vsel %vm123, %v118, %v122
    %v125 = vmul.f32 %v114, %v124
    %v126 = vmul.f32 %v117, %v124
    %v127 = vsub.f32 %v110, %v125
    %v128 = vsub.f32 %v111, %v126
    %v129 = vmul.f32 %v127, %v127
    %v130 = vmul.f32 %v128, %v128
    %v131 = vsel %vm92, %v129, 0.0
    %132 = vadd.xlane.f32.xlu0 %v131
    %v133 = vpop.xlane.xlu0 %132
    %v134 = vsel %vm92, %v130, 0.0
    %135 = vadd.xlane.f32.xlu0 %v134
    %v136 = vpop.xlane.xlu0 %135
    %v137 = vmul.f32 %v133, %v124
    %v138 = vmul.f32 %v136, %v124
    %v139 = vadd.f32 %v137, 1e-12
    %v140 = vadd.f32 %v138, 1e-12
    %v141 = vrsqrt.pop %v139
    %v142 = vmul.f32 %v141, %v139
    %v143 = vmul.f32 %v142, %v141
    %v144 = vmul.f32 0.5, %v143
    %v145 = vsub.f32 1.5, %v144
    %v146 = vmul.f32 %v141, %v145
    %vm147 = vweird.f32 %v139
    %vm148 = vweird.f32 %v141
    %vm149 = vmor %vm147, %vm148
    %v150 = vsel %vm149, %v141, %v146
    %v151 = vrsqrt.pop %v140
    %v152 = vmul.f32 %v151, %v140
    %v153 = vmul.f32 %v152, %v151
    %v154 = vmul.f32 0.5, %v153
    %v155 = vsub.f32 1.5, %v154
    %v156 = vmul.f32 %v151, %v155
    %vm157 = vweird.f32 %v140
    %vm158 = vweird.f32 %v151
    %vm159 = vmor %vm157, %vm158
    %v160 = vsel %vm159, %v151, %v156
    %v161 = vmul.f32 %v127, %v150
    %v162 = vmul.f32 %v128, %v160
    %v163 = vld [vmem:[%s4] sm:$0x1]
    %v165 = vperm.slane %v163, 0
    %v167 = vmul.f32 %v161, %v165
    %v168 = vmul.f32 %v162, %v165
    %v169 = vld [vmem:[%s5] sm:$0x1]
    %v171 = vperm.slane %v169, 0
    %v173 = vadd.f32 %v167, %v171
    %v174 = vadd.f32 %v168, %v171
    %v175 = vpack.c.bf16 %v173, %v173
    %v176 = vpack.c.bf16 %v174, %v174
    %vm177 = vcmask 257024
    %178 = vst.msk [vmem:[%s6] sm:$0xf] %vm177, %v175
    %179 = vst.msk [vmem:[%s6 + $0x4] sm:$0xf] %vm177, %v176
  $region33: #{fwd.17} parent=0 // pred_fallthru
    _
  // Predicated region
  $region34: #{fwd.17} parent=0 // pred_check
    _
  $region35: #{fwd.17} parent=0 // pred_check_branch
    %181 = sbr.rel (0) target = $region37
  $region36: #{fwd.17} parent=0 // pred_region
    _
  $region37: #{fwd.17} parent=0 // pred_fallthru
    _
  // Predicated region
  $region38: #{fwd.17} parent=0 // pred_check
    _
  $region39: #{fwd.17} parent=0 // pred_check_branch
    %183 = sbr.rel (0) target = $region41
  $region40: #{fwd.17} parent=0 // pred_region
    _
  $region41: #{fwd.17} parent=0 // pred_fallthru
    _

</llo_original>
